<compile_context>
chip_gen: v6e
topology: v6e:2x2x1
jax: 0.10.0
libtpu: 0.0.40
codegen_flags: <defaults>
</compile_context>

<pallas_src>
import jax
import jax.numpy as jnp
from jax.experimental import pallas as pl
from jax.experimental.pallas import tpu as pltpu

NODE_PAD = 128   # 81 sudoku cells -> 128 rows (clean MXU / sublane tiles)
LANE_PAD = 128   # all feature dims padded to one 128-lane vreg column


# ----------------------------------------------------------------------------
# Pallas kernel: fused 3x SAGEConv (+ReLU) + final Linear
# ----------------------------------------------------------------------------
def _sage_solver_kernel(
    a_ref,              # (128,128) bf16 row-normalized adjacency (mean aggr)
    x_ref,              # (128,128) f32  padded node features
    w1_ref, b1_ref,     # (256,128) bf16 fused [W1l;W1r], (1,128) f32 bias
    w2_ref, b2_ref,     # (256,128) bf16,                 (1,128) f32
    w3_ref, b3_ref,     # (256,128) bf16,                 (1,128) f32
    wfc_ref, bfc_ref,   # (128,128) bf16,                 (1,128) f32
    out_ref,            # (128,128) f32 padded output logits
):
    a = a_ref[...]  # bf16, resident across all three layers

    def sage(h, w_ref, b_ref):
        # mean-neighbor aggregation, then fused lin_l/lin_r in one matmul:
        #   out = concat([A@h, h], -1) @ concat([Wl; Wr], 0) + b
        h_lo = h.astype(jnp.bfloat16)
        aggr = jnp.dot(a, h_lo, preferred_element_type=jnp.float32)
        cat = jnp.concatenate([aggr.astype(jnp.bfloat16), h_lo], axis=-1)
        return jnp.dot(cat, w_ref[...], preferred_element_type=jnp.float32) + b_ref[...]

    # TODO(synk): bias could also be folded into the fused matmul via a ones
    # column; kept as a broadcast add since it is off the MXU critical chain.
    h = x_ref[...]
    h = jnp.maximum(sage(h, w1_ref, b1_ref), 0.0)
    h = jnp.maximum(sage(h, w2_ref, b2_ref), 0.0)
    h = jnp.maximum(sage(h, w3_ref, b3_ref), 0.0)
    out_ref[...] = (
        jnp.dot(h.astype(jnp.bfloat16), wfc_ref[...],
                preferred_element_type=jnp.float32)
        + bfc_ref[...]
    )


# ----------------------------------------------------------------------------
# Wrapper: pad / fuse / cast operands, single full-VMEM pallas_call
# ----------------------------------------------------------------------------
def _pad2(x, rows, cols):
    r, c = x.shape
    return jnp.pad(x, ((0, rows - r), (0, cols - c)))


def graphsage_sudoku_forward(a_norm, x, params):
    N, _ = x.shape
    O = params["wfc"].shape[1]
    Np, Fp = NODE_PAD, LANE_PAD

    a_p = _pad2(a_norm, Np, Np).astype(jnp.bfloat16)
    x_p = _pad2(x, Np, Fp).astype(jnp.float32)

    def fuse_w(wl, wr):
        # (2*Fp, Fp): rows [0:k] act on aggregated feats, rows [Fp:Fp+k] on
        # self feats; zero-padding elsewhere contributes nothing.
        k, o = wl.shape
        w = jnp.zeros((2 * Fp, Fp), jnp.float32)
        w = w.at[:k, :o].set(wl)
        w = w.at[Fp:Fp + k, :o].set(wr)
        return w.astype(jnp.bfloat16)

    def pad_b(b):
        return _pad2(b, 1, Fp).astype(jnp.float32)

    w1, b1 = fuse_w(params["w1l"], params["w1r"]), pad_b(params["b1"])
    w2, b2 = fuse_w(params["w2l"], params["w2r"]), pad_b(params["b2"])
    w3, b3 = fuse_w(params["w3l"], params["w3r"]), pad_b(params["b3"])
    wfc = _pad2(params["wfc"], Fp, Fp).astype(jnp.bfloat16)
    bfc = pad_b(params["bfc"])

    operands = (a_p, x_p, w1, b1, w2, b2, w3, b3, wfc, bfc)
    vmem_spec = pl.BlockSpec(memory_space=pltpu.MemorySpace.VMEM)

    flops = 3 * (2 * Np * Np * Fp) + 3 * (2 * Np * (2 * Fp) * Fp) + 2 * Np * Fp * Fp
    bytes_accessed = sum(int(o.size) * o.dtype.itemsize for o in operands) + Np * Fp * 4

    out_p = pl.pallas_call(
        _sage_solver_kernel,
        out_shape=jax.ShapeDtypeStruct((Np, Fp), jnp.float32),
        in_specs=[vmem_spec] * len(operands),
        out_specs=vmem_spec,
        cost_estimate=pl.CostEstimate(
            flops=flops, transcendentals=0, bytes_accessed=bytes_accessed),
    )(*operands)
    return out_p[:N, :O]


# ----------------------------------------------------------------------------
# Plain-JAX glue
# ----------------------------------------------------------------------------
def build_norm_adjacency(edge_index, num_nodes):
    """A_norm[i, j] = (# edges j->i) / in_degree(i); rows with deg 0 stay 0.
    edge_index follows PyG COO convention: row 0 = source, row 1 = target."""
    src, dst = edge_index[0], edge_index[1]
    adj = jnp.zeros((num_nodes, num_nodes), dtype=jnp.float32)
    adj = adj.at[dst, src].add(1.0)
    deg = adj.sum(axis=1, keepdims=True)
    return jnp.where(deg > 0, adj / jnp.maximum(deg, 1.0), 0.0)


def init_params(key, input_dim, hidden_dim, output_dim):
    dims = [
        ("w1l", (input_dim, hidden_dim)), ("w1r", (input_dim, hidden_dim)),
        ("b1", (1, hidden_dim)),
        ("w2l", (hidden_dim, hidden_dim)), ("w2r", (hidden_dim, hidden_dim)),
        ("b2", (1, hidden_dim)),
        ("w3l", (hidden_dim, 2 * hidden_dim)), ("w3r", (hidden_dim, 2 * hidden_dim)),
        ("b3", (1, 2 * hidden_dim)),
        ("wfc", (2 * hidden_dim, output_dim)), ("bfc", (1, output_dim)),
    ]
    params = {}
    for name, shape in dims:
        key, sub = jax.random.split(key)
        params[name] = (0.1 * jax.random.normal(sub, shape)).astype(jnp.float32)
    return params


def reference_forward(a_norm, x, p):
    """Pure-JAX f32 reference for correctness checking."""
    def sage(h, wl, wr, b):
        return (a_norm @ h) @ wl + b + h @ wr
    h = jnp.maximum(sage(x, p["w1l"], p["w1r"], p["b1"]), 0.0)
    h = jnp.maximum(sage(h, p["w2l"], p["w2r"], p["b2"]), 0.0)
    h = jnp.maximum(sage(h, p["w3l"], p["w3r"], p["b3"]), 0.0)
    return h @ p["wfc"] + p["bfc"]


if __name__ == "__main__":
    INPUT_DIM, HIDDEN_DIM, OUTPUT_DIM = 16, 32, 9
    NUM_NODES = 81  # Sudoku cells

    # Deterministic Sudoku constraint graph: edge between cells sharing a
    # row, column, or 3x3 box (both directions), 81 * 20 = 1620 edges.
    edges = []
    for i in range(NUM_NODES):
        ri, ci = divmod(i, 9)
        for j in range(NUM_NODES):
            if i == j:
                continue
            rj, cj = divmod(j, 9)
            if ri == rj or ci == cj or (ri // 3 == rj // 3 and ci // 3 == cj // 3):
                edges.append((j, i))  # source j -> target i
    edge_index = jnp.array(edges, dtype=jnp.int32).T  # (2, E)

    key = jax.random.PRNGKey(0)
    key, kx = jax.random.split(key)
    x = jax.random.normal(kx, (NUM_NODES, INPUT_DIM), dtype=jnp.float32)
    params = init_params(key, INPUT_DIM, HIDDEN_DIM, OUTPUT_DIM)

    a_norm = build_norm_adjacency(edge_index, NUM_NODES)

    out = graphsage_sudoku_forward(a_norm, x, params)
    out = jax.block_until_ready(out)

    ref = reference_forward(a_norm, x, params)
    assert out.shape == (NUM_NODES, OUTPUT_DIM)
    # bf16 MXU operands -> tolerance loosened vs. the pure-f32 reference.
    assert jnp.allclose(out, ref, atol=5e-2, rtol=5e-2), float(jnp.abs(out - ref).max())
    print("KERNEL_OK")
</pallas_src>

<mosaic_0001>
module attributes {stable_mosaic.version = 11 : i64} {
  func.func @_sage_solver_kernel(%arg0: memref<128x128xbf16, #tpu.memory_space<vmem>>, %arg1: memref<128x128xf32, #tpu.memory_space<vmem>>, %arg2: memref<256x128xbf16, #tpu.memory_space<vmem>>, %arg3: memref<1x128xf32, #tpu.memory_space<vmem>>, %arg4: memref<256x128xbf16, #tpu.memory_space<vmem>>, %arg5: memref<1x128xf32, #tpu.memory_space<vmem>>, %arg6: memref<256x128xbf16, #tpu.memory_space<vmem>>, %arg7: memref<1x128xf32, #tpu.memory_space<vmem>>, %arg8: memref<128x128xbf16, #tpu.memory_space<vmem>>, %arg9: memref<1x128xf32, #tpu.memory_space<vmem>>, %arg10: memref<128x128xf32, #tpu.memory_space<vmem>>) attributes {dimension_semantics = [], scalar_prefetch = 0 : i64, scratch_operands = 0 : i64, tpu.core_type = #tpu.core_type<tc>} {
    %c0 = arith.constant 0 : index
    %c0_0 = arith.constant 0 : index
    %0 = vector.load %arg0[%c0, %c0_0] : memref<128x128xbf16, #tpu.memory_space<vmem>>, vector<128x128xbf16>
    %c0_1 = arith.constant 0 : index
    %c0_2 = arith.constant 0 : index
    %1 = vector.load %arg1[%c0_1, %c0_2] : memref<128x128xf32, #tpu.memory_space<vmem>>, vector<128x128xf32>
    %2 = arith.truncf %1 : vector<128x128xf32> to vector<128x128xbf16>
    %cst = arith.constant dense<0.000000e+00> : vector<128x128xf32>
    %3 = tpu.matmul %0, %2, %cst {dimension_numbers = #tpu.dot_dimension_numbers<[1], [0], [0], [1], [0, 0, 1, 1], [], []>} : vector<128x128xbf16>, vector<128x128xbf16>, vector<128x128xf32> -> vector<128x128xf32>
    %4 = arith.truncf %3 : vector<128x128xf32> to vector<128x128xbf16>
    %5 = tpu.concatenate %4, %2 in 1 : vector<128x128xbf16>, vector<128x128xbf16> -> vector<128x256xbf16>
    %c0_3 = arith.constant 0 : index
    %c0_4 = arith.constant 0 : index
    %6 = vector.load %arg2[%c0_3, %c0_4] : memref<256x128xbf16, #tpu.memory_space<vmem>>, vector<256x128xbf16>
    %cst_5 = arith.constant dense<0.000000e+00> : vector<128x128xf32>
    %7 = tpu.matmul %5, %6, %cst_5 {dimension_numbers = #tpu.dot_dimension_numbers<[1], [0], [0], [1], [0, 0, 1, 1], [], []>} : vector<128x256xbf16>, vector<256x128xbf16>, vector<128x128xf32> -> vector<128x128xf32>
    %c0_6 = arith.constant 0 : index
    %c0_7 = arith.constant 0 : index
    %8 = vector.load %arg3[%c0_6, %c0_7] : memref<1x128xf32, #tpu.memory_space<vmem>>, vector<1x128xf32>
    %9 = vector.broadcast %8 : vector<1x128xf32> to vector<128x128xf32>
    %10 = arith.addf %7, %9 : vector<128x128xf32>
    %cst_8 = arith.constant 0.000000e+00 : f32
    %11 = vector.broadcast %cst_8 : f32 to vector<128x128xf32>
    %12 = arith.maximumf %10, %11 : vector<128x128xf32>
    %13 = arith.truncf %12 : vector<128x128xf32> to vector<128x128xbf16>
    %cst_9 = arith.constant dense<0.000000e+00> : vector<128x128xf32>
    %14 = tpu.matmul %0, %13, %cst_9 {dimension_numbers = #tpu.dot_dimension_numbers<[1], [0], [0], [1], [0, 0, 1, 1], [], []>} : vector<128x128xbf16>, vector<128x128xbf16>, vector<128x128xf32> -> vector<128x128xf32>
    %15 = arith.truncf %14 : vector<128x128xf32> to vector<128x128xbf16>
    %16 = tpu.concatenate %15, %13 in 1 : vector<128x128xbf16>, vector<128x128xbf16> -> vector<128x256xbf16>
    %c0_10 = arith.constant 0 : index
    %c0_11 = arith.constant 0 : index
    %17 = vector.load %arg4[%c0_10, %c0_11] : memref<256x128xbf16, #tpu.memory_space<vmem>>, vector<256x128xbf16>
    %cst_12 = arith.constant dense<0.000000e+00> : vector<128x128xf32>
    %18 = tpu.matmul %16, %17, %cst_12 {dimension_numbers = #tpu.dot_dimension_numbers<[1], [0], [0], [1], [0, 0, 1, 1], [], []>} : vector<128x256xbf16>, vector<256x128xbf16>, vector<128x128xf32> -> vector<128x128xf32>
    %c0_13 = arith.constant 0 : index
    %c0_14 = arith.constant 0 : index
    %19 = vector.load %arg5[%c0_13, %c0_14] : memref<1x128xf32, #tpu.memory_space<vmem>>, vector<1x128xf32>
    %20 = vector.broadcast %19 : vector<1x128xf32> to vector<128x128xf32>
    %21 = arith.addf %18, %20 : vector<128x128xf32>
    %cst_15 = arith.constant 0.000000e+00 : f32
    %22 = vector.broadcast %cst_15 : f32 to vector<128x128xf32>
    %23 = arith.maximumf %21, %22 : vector<128x128xf32>
    %24 = arith.truncf %23 : vector<128x128xf32> to vector<128x128xbf16>
    %cst_16 = arith.constant dense<0.000000e+00> : vector<128x128xf32>
    %25 = tpu.matmul %0, %24, %cst_16 {dimension_numbers = #tpu.dot_dimension_numbers<[1], [0], [0], [1], [0, 0, 1, 1], [], []>} : vector<128x128xbf16>, vector<128x128xbf16>, vector<128x128xf32> -> vector<128x128xf32>
    %26 = arith.truncf %25 : vector<128x128xf32> to vector<128x128xbf16>
    %27 = tpu.concatenate %26, %24 in 1 : vector<128x128xbf16>, vector<128x128xbf16> -> vector<128x256xbf16>
    %c0_17 = arith.constant 0 : index
    %c0_18 = arith.constant 0 : index
    %28 = vector.load %arg6[%c0_17, %c0_18] : memref<256x128xbf16, #tpu.memory_space<vmem>>, vector<256x128xbf16>
    %cst_19 = arith.constant dense<0.000000e+00> : vector<128x128xf32>
    %29 = tpu.matmul %27, %28, %cst_19 {dimension_numbers = #tpu.dot_dimension_numbers<[1], [0], [0], [1], [0, 0, 1, 1], [], []>} : vector<128x256xbf16>, vector<256x128xbf16>, vector<128x128xf32> -> vector<128x128xf32>
    %c0_20 = arith.constant 0 : index
    %c0_21 = arith.constant 0 : index
    %30 = vector.load %arg7[%c0_20, %c0_21] : memref<1x128xf32, #tpu.memory_space<vmem>>, vector<1x128xf32>
    %31 = vector.broadcast %30 : vector<1x128xf32> to vector<128x128xf32>
    %32 = arith.addf %29, %31 : vector<128x128xf32>
    %cst_22 = arith.constant 0.000000e+00 : f32
    %33 = vector.broadcast %cst_22 : f32 to vector<128x128xf32>
    %34 = arith.maximumf %32, %33 : vector<128x128xf32>
    %35 = arith.truncf %34 : vector<128x128xf32> to vector<128x128xbf16>
    %c0_23 = arith.constant 0 : index
    %c0_24 = arith.constant 0 : index
    %36 = vector.load %arg8[%c0_23, %c0_24] : memref<128x128xbf16, #tpu.memory_space<vmem>>, vector<128x128xbf16>
    %cst_25 = arith.constant dense<0.000000e+00> : vector<128x128xf32>
    %37 = tpu.matmul %35, %36, %cst_25 {dimension_numbers = #tpu.dot_dimension_numbers<[1], [0], [0], [1], [0, 0, 1, 1], [], []>} : vector<128x128xbf16>, vector<128x128xbf16>, vector<128x128xf32> -> vector<128x128xf32>
    %c0_26 = arith.constant 0 : index
    %c0_27 = arith.constant 0 : index
    %38 = vector.load %arg9[%c0_26, %c0_27] : memref<1x128xf32, #tpu.memory_space<vmem>>, vector<1x128xf32>
    %39 = vector.broadcast %38 : vector<1x128xf32> to vector<128x128xf32>
    %40 = arith.addf %37, %39 : vector<128x128xf32>
    %c0_28 = arith.constant 0 : index
    %c0_29 = arith.constant 0 : index
    %41 = vector.load %arg10[%c0_28, %c0_29] : memref<128x128xf32, #tpu.memory_space<vmem>>, vector<128x128xf32>
    tpu.vector_store %arg10[%c0_28, %c0_29], %40 {strides = array<i32>} : memref<128x128xf32, #tpu.memory_space<vmem>>, vector<128x128xf32>,
    return
  }
}

</mosaic_0001>

<llo_original>
// kernel: tpu_custom_call.1
$region0: #{tpu_custom_call.1}
  #allocation0 [shape = 'u32[]', space=smem, size = 0x4, offset = 0x4, fixed_abs, tag = 'smem constant byte address 0x4 - core index']
  #allocation1 [shape = 'u32[144,128]{1,0:T(1,128)}', space=vmem, size = 0x12000, scoped, tag = 'internal scratch']
  %s0 = inlined_call_operand.hbm [shape: bf16[128,128], index: 0, kind: input, shape index: {}]
  %s1 = inlined_call_operand.hbm [shape: f32[128,128], index: 1, kind: input, shape index: {}]
  %s2 = inlined_call_operand.hbm [shape: bf16[256,128], index: 2, kind: input, shape index: {}]
  %s3 = inlined_call_operand.vmem [shape: f32[1,128], index: 3, kind: input, shape index: {}]
  %s4 = inlined_call_operand.hbm [shape: bf16[256,128], index: 4, kind: input, shape index: {}]
  %s5 = inlined_call_operand.vmem [shape: f32[1,128], index: 5, kind: input, shape index: {}]
  %s6 = inlined_call_operand.hbm [shape: bf16[256,128], index: 6, kind: input, shape index: {}]
  %s7 = inlined_call_operand.vmem [shape: f32[1,128], index: 7, kind: input, shape index: {}]
  %s8 = inlined_call_operand.hbm [shape: bf16[128,128], index: 8, kind: input, shape index: {}]
  %s9 = inlined_call_operand.vmem [shape: f32[1,128], index: 9, kind: input, shape index: {}]
  %s10 = inlined_call_operand.hbm [shape: f32[128,128], index: 10, kind: output, shape index: {}]
  %s11 = sld [smem:[#allocation0]]
  $region74: #{tpu_custom_call.1} parent=0
    _
  %s13 = ssub.s32 1, %s11
  %s14 = scalar_select 0, %s13, %s11
  $region1: #{tpu_custom_call.1} parent=0
    #allocation2 [shape = 'u8[32768]{0}', space=vmem, size = 0x8000, scoped, tag = 'input window, operand 0, single buffered']
    #allocation3 [shape = 's32[1]{0}', space=sflag, size = 0x4, scoped, tag = 'scoped memory for tpu_custom_call.1']
    #allocation4 [shape = 's32[1]{0}', space=sflag, size = 0x4, scoped, tag = 'scoped memory for tpu_custom_call.1']
    #allocation5 [shape = 'u8[65536]{0}', space=vmem, size = 0x10000, scoped, tag = 'input window, operand 1, single buffered']
    #allocation6 [shape = 's32[1]{0}', space=sflag, size = 0x4, scoped, tag = 'scoped memory for tpu_custom_call.1']
    #allocation7 [shape = 'u8[65536]{0}', space=vmem, size = 0x10000, scoped, tag = 'input window, operand 2, single buffered']
    #allocation8 [shape = 'u8[65536]{0}', space=vmem, size = 0x10000, scoped, tag = 'input window, operand 4, single buffered']
    #allocation9 [shape = 's32[1]{0}', space=sflag, size = 0x4, scoped, tag = 'scoped memory for tpu_custom_call.1']
    #allocation10 [shape = 'u8[65536]{0}', space=vmem, size = 0x10000, scoped, tag = 'input window, operand 6, single buffered']
    #allocation11 [shape = 'u8[32768]{0}', space=vmem, size = 0x8000, scoped, tag = 'input window, operand 8, single buffered']
    #allocation12 [shape = 's32[1]{0}', space=sflag, size = 0x4, scoped, tag = 'scoped memory for tpu_custom_call.1']
    #allocation13 [shape = 'u8[65536]{0}', space=vmem, size = 0x10000, scoped, tag = 'output window, operand 0, single buffered']
    %15 = vsyncpa [#allocation3], 0
    %16 = vsyncpa [#allocation6], 0
    %17 = vsyncpa [#allocation9], 0
    %18 = vsyncpa [#allocation12], 0
    %19 = vsyncpa [#allocation4], 0
    // Predicated region
    $region2: #{tpu_custom_call.1} parent=1 // pred_check
      _
    $region3: #{tpu_custom_call.1} parent=1 // pred_check_branch
      %21 = sbr.rel (0) target = $region5
    $region4: #{tpu_custom_call.1} parent=1 // pred_region
      %s23 = ssub.s32 1024, 1024
      %24 = vsyncadd [#allocation3], %s23
      %s25 = sshll.u32 [#allocation2], 4
      %s26 = int_to_ptr.vmem [resolvable:$true] %s25
      %31 = dma.hbm_to_vmem [thread:$0]  %s0, 1024, %s26, [#allocation3], 64, 64, 4
    $region5: #{tpu_custom_call.1} parent=1 // pred_fallthru
      _
    // Predicated region
    $region6: #{tpu_custom_call.1} parent=1 // pred_check
      _
    $region7: #{tpu_custom_call.1} parent=1 // pred_check_branch
      %33 = sbr.rel (0) target = $region9
    $region8: #{tpu_custom_call.1} parent=1 // pred_region
      %s35 = ssub.s32 2048, 2048
      %36 = vsyncadd [#allocation6], %s35
      %s37 = sshll.u32 [#allocation5], 4
      %s38 = int_to_ptr.vmem [resolvable:$true] %s37
      %43 = dma.hbm_to_vmem [thread:$0]  %s1, 2048, %s38, [#allocation6], 128, 128, 8
    $region9: #{tpu_custom_call.1} parent=1 // pred_fallthru
      _
    // Predicated region
    $region10: #{tpu_custom_call.1} parent=1 // pred_check
      _
    $region11: #{tpu_custom_call.1} parent=1 // pred_check_branch
      %45 = sbr.rel (0) target = $region13
    $region12: #{tpu_custom_call.1} parent=1 // pred_region
      %s47 = ssub.s32 2048, 2048
      %48 = vsyncadd [#allocation6], %s47
      %s49 = sshll.u32 [#allocation7], 4
      %s50 = int_to_ptr.vmem [resolvable:$true] %s49
      %55 = dma.hbm_to_vmem [thread:$0]  %s2, 2048, %s50, [#allocation6], 64, 64, 4
    $region13: #{tpu_custom_call.1} parent=1 // pred_fallthru
      _
    // Predicated region
    $region14: #{tpu_custom_call.1} parent=1 // pred_check
      _
    $region15: #{tpu_custom_call.1} parent=1 // pred_check_branch
      %57 = sbr.rel (0) target = $region17
    $region16: #{tpu_custom_call.1} parent=1 // pred_region
      _
    $region17: #{tpu_custom_call.1} parent=1 // pred_fallthru
      _
    // Predicated region
    $region18: #{tpu_custom_call.1} parent=1 // pred_check
      _
    $region19: #{tpu_custom_call.1} parent=1 // pred_check_branch
      %59 = sbr.rel (0) target = $region21
    $region20: #{tpu_custom_call.1} parent=1 // pred_region
      %s61 = ssub.s32 2048, 2048
      %62 = vsyncadd [#allocation9], %s61
      %s63 = sshll.u32 [#allocation8], 4
      %s64 = int_to_ptr.vmem [resolvable:$true] %s63
      %69 = dma.hbm_to_vmem [thread:$0]  %s4, 2048, %s64, [#allocation9], 64, 64, 4
    $region21: #{tpu_custom_call.1} parent=1 // pred_fallthru
      _
    // Predicated region
    $region22: #{tpu_custom_call.1} parent=1 // pred_check
      _
    $region23: #{tpu_custom_call.1} parent=1 // pred_check_branch
      %71 = sbr.rel (0) target = $region25
    $region24: #{tpu_custom_call.1} parent=1 // pred_region
      _
    $region25: #{tpu_custom_call.1} parent=1 // pred_fallthru
      _
    // Predicated region
    $region26: #{tpu_custom_call.1} parent=1 // pred_check
      _
    $region27: #{tpu_custom_call.1} parent=1 // pred_check_branch
      %73 = sbr.rel (0) target = $region29
    $region28: #{tpu_custom_call.1} parent=1 // pred_region
      %s75 = ssub.s32 2048, 2048
      %76 = vsyncadd [#allocation9], %s75
      %s77 = sshll.u32 [#allocation10], 4
      %s78 = int_to_ptr.vmem [resolvable:$true] %s77
      %83 = dma.hbm_to_vmem [thread:$0]  %s6, 2048, %s78, [#allocation9], 64, 64, 4
    $region29: #{tpu_custom_call.1} parent=1 // pred_fallthru
      _
    // Predicated region
    $region30: #{tpu_custom_call.1} parent=1 // pred_check
      _
    $region31: #{tpu_custom_call.1} parent=1 // pred_check_branch
      %85 = sbr.rel (0) target = $region33
    $region32: #{tpu_custom_call.1} parent=1 // pred_region
      _
    $region33: #{tpu_custom_call.1} parent=1 // pred_fallthru
      _
    // Predicated region
    $region34: #{tpu_custom_call.1} parent=1 // pred_check
      _
    $region35: #{tpu_custom_call.1} parent=1 // pred_check_branch
      %87 = sbr.rel (0) target = $region37
    $region36: #{tpu_custom_call.1} parent=1 // pred_region
      %s89 = ssub.s32 1024, 1024
      %90 = vsyncadd [#allocation12], %s89
      %s91 = sshll.u32 [#allocation11], 4
      %s92 = int_to_ptr.vmem [resolvable:$true] %s91
      %97 = dma.hbm_to_vmem [thread:$0]  %s8, 1024, %s92, [#allocation12], 64, 64, 4
    $region37: #{tpu_custom_call.1} parent=1 // pred_fallthru
      _
    // Predicated region
    $region38: #{tpu_custom_call.1} parent=1 // pred_check
      _
    $region39: #{tpu_custom_call.1} parent=1 // pred_check_branch
      %99 = sbr.rel (0) target = $region41
    $region40: #{tpu_custom_call.1} parent=1 // pred_region
      _
    $region41: #{tpu_custom_call.1} parent=1 // pred_fallthru
      _
    // Predicated region
    $region42: #{tpu_custom_call.1} parent=1 // pred_check
      _
    $region43: #{tpu_custom_call.1} parent=1 // pred_check_branch
      %101 = sbr.rel (0) target = $region45
    $region44: #{tpu_custom_call.1} parent=1 // pred_region
      %102 = dma.done [#allocation3], 1024
    $region45: #{tpu_custom_call.1} parent=1 // pred_fallthru
      _
    // Predicated region
    $region46: #{tpu_custom_call.1} parent=1 // pred_check
      _
    $region47: #{tpu_custom_call.1} parent=1 // pred_check_branch
      %104 = sbr.rel (0) target = $region49
    $region48: #{tpu_custom_call.1} parent=1 // pred_region
      %105 = dma.done [#allocation6], 2048
    $region49: #{tpu_custom_call.1} parent=1 // pred_fallthru
      _
    // Predicated region
    $region50: #{tpu_custom_call.1} parent=1 // pred_check
      _
    $region51: #{tpu_custom_call.1} parent=1 // pred_check_branch
      %107 = sbr.rel (0) target = $region53
    $region52: #{tpu_custom_call.1} parent=1 // pred_region
      %108 = dma.done [#allocation6], 2048
    $region53: #{tpu_custom_call.1} parent=1 // pred_fallthru
      _
    // Predicated region
    $region54: #{tpu_custom_call.1} parent=1 // pred_check
      _
    $region55: #{tpu_custom_call.1} parent=1 // pred_check_branch
      %110 = sbr.rel (0) target = $region57
    $region56: #{tpu_custom_call.1} parent=1 // pred_region
      %111 = dma.done [#allocation9], 2048
    $region57: #{tpu_custom_call.1} parent=1 // pred_fallthru
      _
    // Predicated region
    $region58: #{tpu_custom_call.1} parent=1 // pred_check
      _
    $region59: #{tpu_custom_call.1} parent=1 // pred_check_branch
      %113 = sbr.rel (0) target = $region61
    $region60: #{tpu_custom_call.1} parent=1 // pred_region
      %114 = dma.done [#allocation9], 2048
    $region61: #{tpu_custom_call.1} parent=1 // pred_fallthru
      _
    // Predicated region
    $region62: #{tpu_custom_call.1} parent=1 // pred_check
      _
    $region63: #{tpu_custom_call.1} parent=1 // pred_check_branch
      %116 = sbr.rel (0) target = $region65
    $region64: #{tpu_custom_call.1} parent=1 // pred_region
      %117 = dma.done [#allocation12], 1024
    $region65: #{tpu_custom_call.1} parent=1 // pred_fallthru
      _
    %v119 = vld [vmem:[#allocation2] sm:$0xf]
    %v120 = vld [vmem:[#allocation2 + $0x4] sm:$0xf]
    %v121 = vld [vmem:[#allocation2 + $0x8] sm:$0xf]
    %v122 = vld [vmem:[#allocation2 + $0xc] sm:$0xf]
    %v123 = vld [vmem:[#allocation2 + $0x10] sm:$0xf]
    %v124 = vld [vmem:[#allocation2 + $0x14] sm:$0xf]
    %v125 = vld [vmem:[#allocation2 + $0x18] sm:$0xf]
    %v126 = vld [vmem:[#allocation2 + $0x1c] sm:$0xf]
    %v127 = vld [vmem:[#allocation2 + $0x20] sm:$0xf]
    %v128 = vld [vmem:[#allocation2 + $0x24] sm:$0xf]
    %v129 = vld [vmem:[#allocation2 + $0x28] sm:$0xf]
    %v130 = vld [vmem:[#allocation2 + $0x2c] sm:$0xf]
    %v131 = vld [vmem:[#allocation2 + $0x30] sm:$0xf]
    %v132 = vld [vmem:[#allocation2 + $0x34] sm:$0xf]
    %v133 = vld [vmem:[#allocation2 + $0x38] sm:$0xf]
    %v134 = vld [vmem:[#allocation2 + $0x3c] sm:$0xf]
    %v135 = vld [vmem:[#allocation5] sm:$0xff]
    %v136 = vld [vmem:[#allocation5 + $0x8] sm:$0xff]
    %v137 = vld [vmem:[#allocation5 + $0x10] sm:$0xff]
    %v138 = vld [vmem:[#allocation5 + $0x18] sm:$0xff]
    %v139 = vld [vmem:[#allocation5 + $0x20] sm:$0xff]
    %v140 = vld [vmem:[#allocation5 + $0x28] sm:$0xff]
    %v141 = vld [vmem:[#allocation5 + $0x30] sm:$0xff]
    %v142 = vld [vmem:[#allocation5 + $0x38] sm:$0xff]
    %v143 = vld [vmem:[#allocation5 + $0x40] sm:$0xff]
    %v144 = vld [vmem:[#allocation5 + $0x48] sm:$0xff]
    %v145 = vld [vmem:[#allocation5 + $0x50] sm:$0xff]
    %v146 = vld [vmem:[#allocation5 + $0x58] sm:$0xff]
    %v147 = vld [vmem:[#allocation5 + $0x60] sm:$0xff]
    %v148 = vld [vmem:[#allocation5 + $0x68] sm:$0xff]
    %v149 = vld [vmem:[#allocation5 + $0x70] sm:$0xff]
    %v150 = vld [vmem:[#allocation5 + $0x78] sm:$0xff]
    %v151 = vpack.c.bf16 %v136, %v135
    %v152 = vpack.c.bf16 %v138, %v137
    %v153 = vpack.c.bf16 %v140, %v139
    %v154 = vpack.c.bf16 %v142, %v141
    %v155 = vpack.c.bf16 %v144, %v143
    %v156 = vpack.c.bf16 %v146, %v145
    %v157 = vpack.c.bf16 %v148, %v147
    %v158 = vpack.c.bf16 %v150, %v149
    %v175 = vunpack.c.l.b16 %v119
    %v176 = vunpack.c.l.b16 %v120
    %v177 = vunpack.c.l.b16 %v121
    %v178 = vunpack.c.l.b16 %v122
    %v179 = vunpack.c.l.b16 %v123
    %v180 = vunpack.c.l.b16 %v124
    %v181 = vunpack.c.l.b16 %v125
    %v182 = vunpack.c.l.b16 %v126
    %v183 = vunpack.c.l.b16 %v127
    %v184 = vunpack.c.l.b16 %v128
    %v185 = vunpack.c.l.b16 %v129
    %v186 = vunpack.c.l.b16 %v130
    %v187 = vunpack.c.l.b16 %v131
    %v188 = vunpack.c.l.b16 %v132
    %v189 = vunpack.c.l.b16 %v133
    %v190 = vunpack.c.l.b16 %v134
    %v191 = vpack.c.b16 %v176, %v175
    %v192 = vpack.c.b16 %v178, %v177
    %v193 = vpack.c.b16 %v180, %v179
    %v194 = vpack.c.b16 %v182, %v181
    %v195 = vpack.c.b16 %v184, %v183
    %v196 = vpack.c.b16 %v186, %v185
    %v197 = vpack.c.b16 %v188, %v187
    %v198 = vpack.c.b16 %v190, %v189
    %207 = vmatprep.subr.bf16.mxu0 0
    %208 = vmatpush1.bf16.msra.mxu0 %v158
    %209 = vmatprep.subr.bf16.mxu0 0
    %210 = vmatpush1.bf16.msra.mxu0 %v157
    %211 = vmatprep.subr.bf16.mxu0 0
    %212 = vmatpush1.bf16.msra.mxu0 %v156
    %213 = vmatprep.subr.bf16.mxu0 0
    %214 = vmatpush1.bf16.msra.mxu0 %v155
    %215 = vmatprep.subr.bf16.mxu0 0
    %216 = vmatpush1.bf16.msra.mxu0 %v154
    %217 = vmatprep.subr.bf16.mxu0 0
    %218 = vmatpush1.bf16.msra.mxu0 %v153
    %219 = vmatprep.subr.bf16.mxu0 0
    %220 = vmatpush1.bf16.msra.mxu0 %v152
    %221 = vmatprep.subr.bf16.mxu0 0
    %222 = vmatpush1.bf16.msra.mxu0 %v151
    %223 = vmatprep.subr.bf16.mxu0 0
    %224 = vmatpush2.bf16.msra.mxu0 0
    %225 = vmatprep.subr.bf16.mxu0 0
    %226 = vmatpush2.bf16.msra.mxu0 0
    %227 = vmatprep.subr.bf16.mxu0 0
    %228 = vmatpush2.bf16.msra.mxu0 0
    %229 = vmatprep.subr.bf16.mxu0 0
    %230 = vmatpush2.bf16.msra.mxu0 0
    %231 = vmatprep.subr.bf16.mxu0 0
    %232 = vmatpush2.bf16.msra.mxu0 0
    %233 = vmatprep.subr.bf16.mxu0 0
    %234 = vmatpush2.bf16.msra.mxu0 0
    %235 = vmatprep.subr.bf16.mxu0 0
    %236 = vmatpush2.bf16.msra.mxu0 0
    %237 = vmatprep.subr.bf16.mxu0 0
    %238 = vmatpush2.bf16.msra.mxu0 0
    %239 = vmatprep.mubr.bf16.mxu0 0
    %240 = vmatmul.mubr.bf16.gmra.mxu0 %v191
    %v241 = vpop.f32.mrf.mxu0
    %v242 = vadd.f32 0.0, %v241
    %v243 = vpop.f32.mrf.mxu0
    %v244 = vpop.f32.mrf.mxu0
    %v245 = vadd.f32 0.0, %v244
    %v246 = vpop.f32.mrf.mxu0
    %247 = vmatprep.mubr.bf16.mxu0 0
    %248 = vmatmul.mubr.bf16.gmra.mxu0 %v192
    %v249 = vpop.f32.mrf.mxu0
    %v250 = vadd.f32 0.0, %v249
    %v251 = vpop.f32.mrf.mxu0
    %v252 = vpop.f32.mrf.mxu0
    %v253 = vadd.f32 0.0, %v252
    %v254 = vpop.f32.mrf.mxu0
    %255 = vmatprep.mubr.bf16.mxu0 0
    %256 = vmatmul.mubr.bf16.gmra.mxu0 %v193
    %v257 = vpop.f32.mrf.mxu0
    %v258 = vadd.f32 0.0, %v257
    %v259 = vpop.f32.mrf.mxu0
    %v260 = vpop.f32.mrf.mxu0
    %v261 = vadd.f32 0.0, %v260
    %v262 = vpop.f32.mrf.mxu0
    %263 = vmatprep.mubr.bf16.mxu0 0
    %264 = vmatmul.mubr.bf16.gmra.mxu0 %v194
    %v265 = vpop.f32.mrf.mxu0
    %v266 = vadd.f32 0.0, %v265
    %v267 = vpop.f32.mrf.mxu0
    %v268 = vpop.f32.mrf.mxu0
    %v269 = vadd.f32 0.0, %v268
    %v270 = vpop.f32.mrf.mxu0
    %271 = vmatprep.mubr.bf16.mxu0 0
    %272 = vmatmul.mubr.bf16.gmra.mxu0 %v195
    %v273 = vpop.f32.mrf.mxu0
    %v274 = vadd.f32 0.0, %v273
    %v275 = vpop.f32.mrf.mxu0
    %v276 = vpop.f32.mrf.mxu0
    %v277 = vadd.f32 0.0, %v276
    %v278 = vpop.f32.mrf.mxu0
    %279 = vmatprep.mubr.bf16.mxu0 0
    %280 = vmatmul.mubr.bf16.gmra.mxu0 %v196
    %v281 = vpop.f32.mrf.mxu0
    %v282 = vadd.f32 0.0, %v281
    %v283 = vpop.f32.mrf.mxu0
    %v284 = vpop.f32.mrf.mxu0
    %v285 = vadd.f32 0.0, %v284
    %v286 = vpop.f32.mrf.mxu0
    %287 = vmatprep.mubr.bf16.mxu0 0
    %288 = vmatmul.mubr.bf16.gmra.mxu0 %v197
    %v289 = vpop.f32.mrf.mxu0
    %v290 = vadd.f32 0.0, %v289
    %v291 = vpop.f32.mrf.mxu0
    %v292 = vpop.f32.mrf.mxu0
    %v293 = vadd.f32 0.0, %v292
    %v294 = vpop.f32.mrf.mxu0
    %295 = vmatprep.mubr.bf16.mxu0 0
    %296 = vmatmul.mubr.bf16.gmra.mxu0 %v198
    %v297 = vpop.f32.mrf.mxu0
    %v298 = vadd.f32 0.0, %v297
    %v299 = vpop.f32.mrf.mxu0
    %v300 = vpop.f32.mrf.mxu0
    %v301 = vadd.f32 0.0, %v300
    %v302 = vpop.f32.mrf.mxu0
    %303 = vdwg.mxu0
    %v304 = vpack.c.bf16 %v245, %v242
    %v305 = vpack.c.bf16 %v253, %v250
    %v306 = vpack.c.bf16 %v261, %v258
    %v307 = vpack.c.bf16 %v269, %v266
    %v308 = vpack.c.bf16 %v277, %v274
    %v309 = vpack.c.bf16 %v285, %v282
    %v310 = vpack.c.bf16 %v293, %v290
    %v311 = vpack.c.bf16 %v301, %v298
    %v312 = vld [vmem:[#allocation7] sm:$0xf]
    %v313 = vld [vmem:[#allocation7 + $0x4] sm:$0xf]
    %v314 = vld [vmem:[#allocation7 + $0x8] sm:$0xf]
    %v315 = vld [vmem:[#allocation7 + $0xc] sm:$0xf]
    %v316 = vld [vmem:[#allocation7 + $0x10] sm:$0xf]
    %v317 = vld [vmem:[#allocation7 + $0x14] sm:$0xf]
    %v318 = vld [vmem:[#allocation7 + $0x18] sm:$0xf]
    %v319 = vld [vmem:[#allocation7 + $0x1c] sm:$0xf]
    %v320 = vld [vmem:[#allocation7 + $0x20] sm:$0xf]
    %v321 = vld [vmem:[#allocation7 + $0x24] sm:$0xf]
    %v322 = vld [vmem:[#allocation7 + $0x28] sm:$0xf]
    %v323 = vld [vmem:[#allocation7 + $0x2c] sm:$0xf]
    %v324 = vld [vmem:[#allocation7 + $0x30] sm:$0xf]
    %v325 = vld [vmem:[#allocation7 + $0x34] sm:$0xf]
    %v326 = vld [vmem:[#allocation7 + $0x38] sm:$0xf]
    %v327 = vld [vmem:[#allocation7 + $0x3c] sm:$0xf]
    %v328 = vld [vmem:[#allocation7 + $0x40] sm:$0xf]
    %v329 = vld [vmem:[#allocation7 + $0x44] sm:$0xf]
    %v330 = vld [vmem:[#allocation7 + $0x48] sm:$0xf]
    %v331 = vld [vmem:[#allocation7 + $0x4c] sm:$0xf]
    %v332 = vld [vmem:[#allocation7 + $0x50] sm:$0xf]
    %v333 = vld [vmem:[#allocation7 + $0x54] sm:$0xf]
    %v334 = vld [vmem:[#allocation7 + $0x58] sm:$0xf]
    %v335 = vld [vmem:[#allocation7 + $0x5c] sm:$0xf]
    %v336 = vld [vmem:[#allocation7 + $0x60] sm:$0xf]
    %v337 = vld [vmem:[#allocation7 + $0x64] sm:$0xf]
    %v338 = vld [vmem:[#allocation7 + $0x68] sm:$0xf]
    %v339 = vld [vmem:[#allocation7 + $0x6c] sm:$0xf]
    %v340 = vld [vmem:[#allocation7 + $0x70] sm:$0xf]
    %v341 = vld [vmem:[#allocation7 + $0x74] sm:$0xf]
    %v342 = vld [vmem:[#allocation7 + $0x78] sm:$0xf]
    %v343 = vld [vmem:[#allocation7 + $0x7c] sm:$0xf]
    %v344 = vld [vmem:[%s3] sm:$0x1]
    %v346 = vlaneseq
    %v347 = vshrl.u32 %v346, 7
    %v348 = vsub.s32 0, %v347
    %v349 = vrot.slane %v344, %v348
    %v383 = vunpack.c.l.b16 %v312
    %v384 = vunpack.c.l.b16 %v313
    %v385 = vunpack.c.l.b16 %v314
    %v386 = vunpack.c.l.b16 %v315
    %v387 = vunpack.c.l.b16 %v316
    %v388 = vunpack.c.l.b16 %v317
    %v389 = vunpack.c.l.b16 %v318
    %v390 = vunpack.c.l.b16 %v319
    %v391 = vunpack.c.l.b16 %v320
    %v392 = vunpack.c.l.b16 %v321
    %v393 = vunpack.c.l.b16 %v322
    %v394 = vunpack.c.l.b16 %v323
    %v395 = vunpack.c.l.b16 %v324
    %v396 = vunpack.c.l.b16 %v325
    %v397 = vunpack.c.l.b16 %v326
    %v398 = vunpack.c.l.b16 %v327
    %v399 = vunpack.c.l.b16 %v328
    %v400 = vunpack.c.l.b16 %v329
    %v401 = vunpack.c.l.b16 %v330
    %v402 = vunpack.c.l.b16 %v331
    %v403 = vunpack.c.l.b16 %v332
    %v404 = vunpack.c.l.b16 %v333
    %v405 = vunpack.c.l.b16 %v334
    %v406 = vunpack.c.l.b16 %v335
    %v407 = vunpack.c.l.b16 %v336
    %v408 = vunpack.c.l.b16 %v337
    %v409 = vunpack.c.l.b16 %v338
    %v410 = vunpack.c.l.b16 %v339
    %v411 = vunpack.c.l.b16 %v340
    %v412 = vunpack.c.l.b16 %v341
    %v413 = vunpack.c.l.b16 %v342
    %v414 = vunpack.c.l.b16 %v343
    %v415 = vpack.c.b16 %v384, %v383
    %v416 = vpack.c.b16 %v386, %v385
    %v417 = vpack.c.b16 %v388, %v387
    %v418 = vpack.c.b16 %v390, %v389
    %v419 = vpack.c.b16 %v392, %v391
    %v420 = vpack.c.b16 %v394, %v393
    %v421 = vpack.c.b16 %v396, %v395
    %v422 = vpack.c.b16 %v398, %v397
    %v423 = vpack.c.b16 %v400, %v399
    %v424 = vpack.c.b16 %v402, %v401
    %v425 = vpack.c.b16 %v404, %v403
    %v426 = vpack.c.b16 %v406, %v405
    %v427 = vpack.c.b16 %v408, %v407
    %v428 = vpack.c.b16 %v410, %v409
    %v429 = vpack.c.b16 %v412, %v411
    %v430 = vpack.c.b16 %v414, %v413
    %447 = vmatprep.subr.bf16.mxu0 0
    %448 = vmatpush1.bf16.msra.mxu0 %v422
    %449 = vmatprep.subr.bf16.mxu0 0
    %450 = vmatpush1.bf16.msra.mxu0 %v421
    %451 = vmatprep.subr.bf16.mxu0 0
    %452 = vmatpush1.bf16.msra.mxu0 %v420
    %453 = vmatprep.subr.bf16.mxu0 0
    %454 = vmatpush1.bf16.msra.mxu0 %v419
    %455 = vmatprep.subr.bf16.mxu0 0
    %456 = vmatpush1.bf16.msra.mxu0 %v418
    %457 = vmatprep.subr.bf16.mxu0 0
    %458 = vmatpush1.bf16.msra.mxu0 %v417
    %459 = vmatprep.subr.bf16.mxu0 0
    %460 = vmatpush1.bf16.msra.mxu0 %v416
    %461 = vmatprep.subr.bf16.mxu0 0
    %462 = vmatpush1.bf16.msra.mxu0 %v415
    %463 = vmatprep.subr.bf16.mxu0 0
    %464 = vmatpush2.bf16.msra.mxu0 %v430
    %465 = vmatprep.subr.bf16.mxu0 0
    %466 = vmatpush2.bf16.msra.mxu0 %v429
    %467 = vmatprep.subr.bf16.mxu0 0
    %468 = vmatpush2.bf16.msra.mxu0 %v428
    %469 = vmatprep.subr.bf16.mxu0 0
    %470 = vmatpush2.bf16.msra.mxu0 %v427
    %471 = vmatprep.subr.bf16.mxu0 0
    %472 = vmatpush2.bf16.msra.mxu0 %v426
    %473 = vmatprep.subr.bf16.mxu0 0
    %474 = vmatpush2.bf16.msra.mxu0 %v425
    %475 = vmatprep.subr.bf16.mxu0 0
    %476 = vmatpush2.bf16.msra.mxu0 %v424
    %477 = vmatprep.subr.bf16.mxu0 0
    %478 = vmatpush2.bf16.msra.mxu0 %v423
    %479 = vmatprep.mubr.bf16.mxu0 %v151
    %480 = vmatmul.mubr.bf16.gmra.mxu0 %v304
    %v481 = vpop.f32.mrf.mxu0
    %v482 = vadd.f32 %v349, %v481
    %v483 = vpop.f32.mrf.mxu0
    %v484 = vpop.f32.mrf.mxu0
    %v485 = vadd.f32 %v349, %v484
    %v486 = vpop.f32.mrf.mxu0
    %487 = vmatprep.mubr.bf16.mxu0 %v152
    %488 = vmatmul.mubr.bf16.gmra.mxu0 %v305
    %v489 = vpop.f32.mrf.mxu0
    %v490 = vadd.f32 %v349, %v489
    %v491 = vpop.f32.mrf.mxu0
    %v492 = vpop.f32.mrf.mxu0
    %v493 = vadd.f32 %v349, %v492
    %v494 = vpop.f32.mrf.mxu0
    %495 = vmatprep.mubr.bf16.mxu0 %v153
    %496 = vmatmul.mubr.bf16.gmra.mxu0 %v306
    %v497 = vpop.f32.mrf.mxu0
    %v498 = vadd.f32 %v349, %v497
    %v499 = vpop.f32.mrf.mxu0
    %v500 = vpop.f32.mrf.mxu0
    %v501 = vadd.f32 %v349, %v500
    %v502 = vpop.f32.mrf.mxu0
    %503 = vmatprep.mubr.bf16.mxu0 %v154
    %504 = vmatmul.mubr.bf16.gmra.mxu0 %v307
    %v505 = vpop.f32.mrf.mxu0
    %v506 = vadd.f32 %v349, %v505
    %v507 = vpop.f32.mrf.mxu0
    %v508 = vpop.f32.mrf.mxu0
    %v509 = vadd.f32 %v349, %v508
    %v510 = vpop.f32.mrf.mxu0
    %511 = vmatprep.mubr.bf16.mxu0 %v155
    %512 = vmatmul.mubr.bf16.gmra.mxu0 %v308
    %v513 = vpop.f32.mrf.mxu0
    %v514 = vadd.f32 %v349, %v513
    %v515 = vpop.f32.mrf.mxu0
    %v516 = vpop.f32.mrf.mxu0
    %v517 = vadd.f32 %v349, %v516
    %v518 = vpop.f32.mrf.mxu0
    %519 = vmatprep.mubr.bf16.mxu0 %v156
    %520 = vmatmul.mubr.bf16.gmra.mxu0 %v309
    %v521 = vpop.f32.mrf.mxu0
    %v522 = vadd.f32 %v349, %v521
    %v523 = vpop.f32.mrf.mxu0
    %v524 = vpop.f32.mrf.mxu0
    %v525 = vadd.f32 %v349, %v524
    %v526 = vpop.f32.mrf.mxu0
    %527 = vmatprep.mubr.bf16.mxu0 %v157
    %528 = vmatmul.mubr.bf16.gmra.mxu0 %v310
    %v529 = vpop.f32.mrf.mxu0
    %v530 = vadd.f32 %v349, %v529
    %v531 = vpop.f32.mrf.mxu0
    %v532 = vpop.f32.mrf.mxu0
    %v533 = vadd.f32 %v349, %v532
    %v534 = vpop.f32.mrf.mxu0
    %535 = vmatprep.mubr.bf16.mxu0 %v158
    %536 = vmatmul.mubr.bf16.gmra.mxu0 %v311
    %v537 = vpop.f32.mrf.mxu0
    %v538 = vadd.f32 %v349, %v537
    %v539 = vpop.f32.mrf.mxu0
    %v540 = vpop.f32.mrf.mxu0
    %v541 = vadd.f32 %v349, %v540
    %v542 = vpop.f32.mrf.mxu0
    %543 = vdwg.mxu0
    %v544 = vmax.f32 %v482, 0.0
    %v545 = vmax.f32 %v485, 0.0
    %v546 = vmax.f32 %v490, 0.0
    %v547 = vmax.f32 %v493, 0.0
    %v548 = vmax.f32 %v498, 0.0
    %v549 = vmax.f32 %v501, 0.0
    %v550 = vmax.f32 %v506, 0.0
    %v551 = vmax.f32 %v509, 0.0
    %v552 = vmax.f32 %v514, 0.0
    %v553 = vmax.f32 %v517, 0.0
    %v554 = vmax.f32 %v522, 0.0
    %v555 = vmax.f32 %v525, 0.0
    %v556 = vmax.f32 %v530, 0.0
    %v557 = vmax.f32 %v533, 0.0
    %v558 = vmax.f32 %v538, 0.0
    %v559 = vmax.f32 %v541, 0.0
    %v560 = vpack.c.bf16 %v545, %v544
    %v561 = vpack.c.bf16 %v547, %v546
    %v562 = vpack.c.bf16 %v549, %v548
    %v563 = vpack.c.bf16 %v551, %v550
    %v564 = vpack.c.bf16 %v553, %v552
    %v565 = vpack.c.bf16 %v555, %v554
    %v566 = vpack.c.bf16 %v557, %v556
    %v567 = vpack.c.bf16 %v559, %v558
    %568 = vmatprep.subr.bf16.mxu0 0
    %569 = vmatpush1.bf16.msra.mxu0 %v567
    %570 = vmatprep.subr.bf16.mxu0 0
    %571 = vmatpush1.bf16.msra.mxu0 %v566
    %572 = vmatprep.subr.bf16.mxu0 0
    %573 = vmatpush1.bf16.msra.mxu0 %v565
    %574 = vmatprep.subr.bf16.mxu0 0
    %575 = vmatpush1.bf16.msra.mxu0 %v564
    %576 = vmatprep.subr.bf16.mxu0 0
    %577 = vmatpush1.bf16.msra.mxu0 %v563
    %578 = vmatprep.subr.bf16.mxu0 0
    %579 = vmatpush1.bf16.msra.mxu0 %v562
    %580 = vmatprep.subr.bf16.mxu0 0
    %581 = vmatpush1.bf16.msra.mxu0 %v561
    %582 = vmatprep.subr.bf16.mxu0 0
    %583 = vmatpush1.bf16.msra.mxu0 %v560
    %584 = vmatprep.subr.bf16.mxu0 0
    %585 = vmatpush2.bf16.msra.mxu0 0
    %586 = vmatprep.subr.bf16.mxu0 0
    %587 = vmatpush2.bf16.msra.mxu0 0
    %588 = vmatprep.subr.bf16.mxu0 0
    %589 = vmatpush2.bf16.msra.mxu0 0
    %590 = vmatprep.subr.bf16.mxu0 0
    %591 = vmatpush2.bf16.msra.mxu0 0
    %592 = vmatprep.subr.bf16.mxu0 0
    %593 = vmatpush2.bf16.msra.mxu0 0
    %594 = vmatprep.subr.bf16.mxu0 0
    %595 = vmatpush2.bf16.msra.mxu0 0
    %596 = vmatprep.subr.bf16.mxu0 0
    %597 = vmatpush2.bf16.msra.mxu0 0
    %598 = vmatprep.subr.bf16.mxu0 0
    %599 = vmatpush2.bf16.msra.mxu0 0
    %600 = vmatprep.mubr.bf16.mxu0 0
    %601 = vmatmul.mubr.bf16.gmra.mxu0 %v191
    %v602 = vpop.f32.mrf.mxu0
    %v603 = vadd.f32 0.0, %v602
    %v604 = vpop.f32.mrf.mxu0
    %v605 = vpop.f32.mrf.mxu0
    %v606 = vadd.f32 0.0, %v605
    %v607 = vpop.f32.mrf.mxu0
    %608 = vmatprep.mubr.bf16.mxu0 0
    %609 = vmatmul.mubr.bf16.gmra.mxu0 %v192
    %v610 = vpop.f32.mrf.mxu0
    %v611 = vadd.f32 0.0, %v610
    %v612 = vpop.f32.mrf.mxu0
    %v613 = vpop.f32.mrf.mxu0
    %v614 = vadd.f32 0.0, %v613
    %v615 = vpop.f32.mrf.mxu0
    %616 = vmatprep.mubr.bf16.mxu0 0
    %617 = vmatmul.mubr.bf16.gmra.mxu0 %v193
    %v618 = vpop.f32.mrf.mxu0
    %v619 = vadd.f32 0.0, %v618
    %v620 = vpop.f32.mrf.mxu0
    %v621 = vpop.f32.mrf.mxu0
    %v622 = vadd.f32 0.0, %v621
    %v623 = vpop.f32.mrf.mxu0
    %624 = vmatprep.mubr.bf16.mxu0 0
    %625 = vmatmul.mubr.bf16.gmra.mxu0 %v194
    %v626 = vpop.f32.mrf.mxu0
    %v627 = vadd.f32 0.0, %v626
    %v628 = vpop.f32.mrf.mxu0
    %v629 = vpop.f32.mrf.mxu0
    %v630 = vadd.f32 0.0, %v629
    %v631 = vpop.f32.mrf.mxu0
    %632 = vmatprep.mubr.bf16.mxu0 0
    %633 = vmatmul.mubr.bf16.gmra.mxu0 %v195
    %v634 = vpop.f32.mrf.mxu0
    %v635 = vadd.f32 0.0, %v634
    %v636 = vpop.f32.mrf.mxu0
    %v637 = vpop.f32.mrf.mxu0
    %v638 = vadd.f32 0.0, %v637
    %v639 = vpop.f32.mrf.mxu0
    %640 = vmatprep.mubr.bf16.mxu0 0
    %641 = vmatmul.mubr.bf16.gmra.mxu0 %v196
    %v642 = vpop.f32.mrf.mxu0
    %v643 = vadd.f32 0.0, %v642
    %v644 = vpop.f32.mrf.mxu0
    %v645 = vpop.f32.mrf.mxu0
    %v646 = vadd.f32 0.0, %v645
    %v647 = vpop.f32.mrf.mxu0
    %648 = vmatprep.mubr.bf16.mxu0 0
    %649 = vmatmul.mubr.bf16.gmra.mxu0 %v197
    %v650 = vpop.f32.mrf.mxu0
    %v651 = vadd.f32 0.0, %v650
    %v652 = vpop.f32.mrf.mxu0
    %v653 = vpop.f32.mrf.mxu0
    %v654 = vadd.f32 0.0, %v653
    %v655 = vpop.f32.mrf.mxu0
    %656 = vmatprep.mubr.bf16.mxu0 0
    %657 = vmatmul.mubr.bf16.gmra.mxu0 %v198
    %v658 = vpop.f32.mrf.mxu0
    %v659 = vadd.f32 0.0, %v658
    %v660 = vpop.f32.mrf.mxu0
    %v661 = vpop.f32.mrf.mxu0
    %v662 = vadd.f32 0.0, %v661
    %v663 = vpop.f32.mrf.mxu0
    %664 = vdwg.mxu0
    %v665 = vpack.c.bf16 %v606, %v603
    %v666 = vpack.c.bf16 %v614, %v611
    %v667 = vpack.c.bf16 %v622, %v619
    %v668 = vpack.c.bf16 %v630, %v627
    %v669 = vpack.c.bf16 %v638, %v635
    %v670 = vpack.c.bf16 %v646, %v643
    %v671 = vpack.c.bf16 %v654, %v651
    %v672 = vpack.c.bf16 %v662, %v659
    %v673 = vld [vmem:[#allocation8] sm:$0xf]
    %v674 = vld [vmem:[#allocation8 + $0x4] sm:$0xf]
    %v675 = vld [vmem:[#allocation8 + $0x8] sm:$0xf]
    %v676 = vld [vmem:[#allocation8 + $0xc] sm:$0xf]
    %v677 = vld [vmem:[#allocation8 + $0x10] sm:$0xf]
    %v678 = vld [vmem:[#allocation8 + $0x14] sm:$0xf]
    %v679 = vld [vmem:[#allocation8 + $0x18] sm:$0xf]
    %v680 = vld [vmem:[#allocation8 + $0x1c] sm:$0xf]
    %v681 = vld [vmem:[#allocation8 + $0x20] sm:$0xf]
    %v682 = vld [vmem:[#allocation8 + $0x24] sm:$0xf]
    %v683 = vld [vmem:[#allocation8 + $0x28] sm:$0xf]
    %v684 = vld [vmem:[#allocation8 + $0x2c] sm:$0xf]
    %v685 = vld [vmem:[#allocation8 + $0x30] sm:$0xf]
    %v686 = vld [vmem:[#allocation8 + $0x34] sm:$0xf]
    %v687 = vld [vmem:[#allocation8 + $0x38] sm:$0xf]
    %v688 = vld [vmem:[#allocation8 + $0x3c] sm:$0xf]
    %v689 = vld [vmem:[#allocation8 + $0x40] sm:$0xf]
    %v690 = vld [vmem:[#allocation8 + $0x44] sm:$0xf]
    %v691 = vld [vmem:[#allocation8 + $0x48] sm:$0xf]
    %v692 = vld [vmem:[#allocation8 + $0x4c] sm:$0xf]
    %v693 = vld [vmem:[#allocation8 + $0x50] sm:$0xf]
    %v694 = vld [vmem:[#allocation8 + $0x54] sm:$0xf]
    %v695 = vld [vmem:[#allocation8 + $0x58] sm:$0xf]
    %v696 = vld [vmem:[#allocation8 + $0x5c] sm:$0xf]
    %v697 = vld [vmem:[#allocation8 + $0x60] sm:$0xf]
    %v698 = vld [vmem:[#allocation8 + $0x64] sm:$0xf]
    %v699 = vld [vmem:[#allocation8 + $0x68] sm:$0xf]
    %v700 = vld [vmem:[#allocation8 + $0x6c] sm:$0xf]
    %v701 = vld [vmem:[#allocation8 + $0x70] sm:$0xf]
    %v702 = vld [vmem:[#allocation8 + $0x74] sm:$0xf]
    %v703 = vld [vmem:[#allocation8 + $0x78] sm:$0xf]
    %v704 = vld [vmem:[#allocation8 + $0x7c] sm:$0xf]
    %v705 = vld [vmem:[%s5] sm:$0x1]
    %v707 = vlaneseq
    %v708 = vshrl.u32 %v707, 7
    %v709 = vsub.s32 0, %v708
    %v710 = vrot.slane %v705, %v709
    %v744 = vunpack.c.l.b16 %v673
    %v745 = vunpack.c.l.b16 %v674
    %v746 = vunpack.c.l.b16 %v675
    %v747 = vunpack.c.l.b16 %v676
    %v748 = vunpack.c.l.b16 %v677
    %v749 = vunpack.c.l.b16 %v678
    %v750 = vunpack.c.l.b16 %v679
    %v751 = vunpack.c.l.b16 %v680
    %v752 = vunpack.c.l.b16 %v681
    %v753 = vunpack.c.l.b16 %v682
    %v754 = vunpack.c.l.b16 %v683
    %v755 = vunpack.c.l.b16 %v684
    %v756 = vunpack.c.l.b16 %v685
    %v757 = vunpack.c.l.b16 %v686
    %v758 = vunpack.c.l.b16 %v687
    %v759 = vunpack.c.l.b16 %v688
    %v760 = vunpack.c.l.b16 %v689
    %v761 = vunpack.c.l.b16 %v690
    %v762 = vunpack.c.l.b16 %v691
    %v763 = vunpack.c.l.b16 %v692
    %v764 = vunpack.c.l.b16 %v693
    %v765 = vunpack.c.l.b16 %v694
    %v766 = vunpack.c.l.b16 %v695
    %v767 = vunpack.c.l.b16 %v696
    %v768 = vunpack.c.l.b16 %v697
    %v769 = vunpack.c.l.b16 %v698
    %v770 = vunpack.c.l.b16 %v699
    %v771 = vunpack.c.l.b16 %v700
    %v772 = vunpack.c.l.b16 %v701
    %v773 = vunpack.c.l.b16 %v702
    %v774 = vunpack.c.l.b16 %v703
    %v775 = vunpack.c.l.b16 %v704
    %v776 = vpack.c.b16 %v745, %v744
    %v777 = vpack.c.b16 %v747, %v746
    %v778 = vpack.c.b16 %v749, %v748
    %v779 = vpack.c.b16 %v751, %v750
    %v780 = vpack.c.b16 %v753, %v752
    %v781 = vpack.c.b16 %v755, %v754
    %v782 = vpack.c.b16 %v757, %v756
    %v783 = vpack.c.b16 %v759, %v758
    %v784 = vpack.c.b16 %v761, %v760
    %v785 = vpack.c.b16 %v763, %v762
    %v786 = vpack.c.b16 %v765, %v764
    %v787 = vpack.c.b16 %v767, %v766
    %v788 = vpack.c.b16 %v769, %v768
    %v789 = vpack.c.b16 %v771, %v770
    %v790 = vpack.c.b16 %v773, %v772
    %v791 = vpack.c.b16 %v775, %v774
    %808 = vmatprep.subr.bf16.mxu0 0
    %809 = vmatpush1.bf16.msra.mxu0 %v783
    %810 = vmatprep.subr.bf16.mxu0 0
    %811 = vmatpush1.bf16.msra.mxu0 %v782
    %812 = vmatprep.subr.bf16.mxu0 0
    %813 = vmatpush1.bf16.msra.mxu0 %v781
    %814 = vmatprep.subr.bf16.mxu0 0
    %815 = vmatpush1.bf16.msra.mxu0 %v780
    %816 = vmatprep.subr.bf16.mxu0 0
    %817 = vmatpush1.bf16.msra.mxu0 %v779
    %818 = vmatprep.subr.bf16.mxu0 0
    %819 = vmatpush1.bf16.msra.mxu0 %v778
    %820 = vmatprep.subr.bf16.mxu0 0
    %821 = vmatpush1.bf16.msra.mxu0 %v777
    %822 = vmatprep.subr.bf16.mxu0 0
    %823 = vmatpush1.bf16.msra.mxu0 %v776
    %824 = vmatprep.subr.bf16.mxu0 0
    %825 = vmatpush2.bf16.msra.mxu0 %v791
    %826 = vmatprep.subr.bf16.mxu0 0
    %827 = vmatpush2.bf16.msra.mxu0 %v790
    %828 = vmatprep.subr.bf16.mxu0 0
    %829 = vmatpush2.bf16.msra.mxu0 %v789
    %830 = vmatprep.subr.bf16.mxu0 0
    %831 = vmatpush2.bf16.msra.mxu0 %v788
    %832 = vmatprep.subr.bf16.mxu0 0
    %833 = vmatpush2.bf16.msra.mxu0 %v787
    %834 = vmatprep.subr.bf16.mxu0 0
    %835 = vmatpush2.bf16.msra.mxu0 %v786
    %836 = vmatprep.subr.bf16.mxu0 0
    %837 = vmatpush2.bf16.msra.mxu0 %v785
    %838 = vmatprep.subr.bf16.mxu0 0
    %839 = vmatpush2.bf16.msra.mxu0 %v784
    %840 = vmatprep.mubr.bf16.mxu0 %v560
    %841 = vmatmul.mubr.bf16.gmra.mxu0 %v665
    %v842 = vpop.f32.mrf.mxu0
    %v843 = vadd.f32 %v710, %v842
    %v844 = vpop.f32.mrf.mxu0
    %v845 = vpop.f32.mrf.mxu0
    %v846 = vadd.f32 %v710, %v845
    %v847 = vpop.f32.mrf.mxu0
    %848 = vmatprep.mubr.bf16.mxu0 %v561
    %849 = vmatmul.mubr.bf16.gmra.mxu0 %v666
    %v850 = vpop.f32.mrf.mxu0
    %v851 = vadd.f32 %v710, %v850
    %v852 = vpop.f32.mrf.mxu0
    %v853 = vpop.f32.mrf.mxu0
    %v854 = vadd.f32 %v710, %v853
    %v855 = vpop.f32.mrf.mxu0
    %856 = vmatprep.mubr.bf16.mxu0 %v562
    %857 = vmatmul.mubr.bf16.gmra.mxu0 %v667
    %v858 = vpop.f32.mrf.mxu0
    %v859 = vadd.f32 %v710, %v858
    %v860 = vpop.f32.mrf.mxu0
    %v861 = vpop.f32.mrf.mxu0
    %v862 = vadd.f32 %v710, %v861
    %v863 = vpop.f32.mrf.mxu0
    %864 = vmatprep.mubr.bf16.mxu0 %v563
    %865 = vmatmul.mubr.bf16.gmra.mxu0 %v668
    %v866 = vpop.f32.mrf.mxu0
    %v867 = vadd.f32 %v710, %v866
    %v868 = vpop.f32.mrf.mxu0
    %v869 = vpop.f32.mrf.mxu0
    %v870 = vadd.f32 %v710, %v869
    %v871 = vpop.f32.mrf.mxu0
    %872 = vmatprep.mubr.bf16.mxu0 %v564
    %873 = vmatmul.mubr.bf16.gmra.mxu0 %v669
    %v874 = vpop.f32.mrf.mxu0
    %v875 = vadd.f32 %v710, %v874
    %v876 = vpop.f32.mrf.mxu0
    %v877 = vpop.f32.mrf.mxu0
    %v878 = vadd.f32 %v710, %v877
    %v879 = vpop.f32.mrf.mxu0
    %880 = vmatprep.mubr.bf16.mxu0 %v565
    %881 = vmatmul.mubr.bf16.gmra.mxu0 %v670
    %v882 = vpop.f32.mrf.mxu0
    %v883 = vadd.f32 %v710, %v882
    %v884 = vpop.f32.mrf.mxu0
    %v885 = vpop.f32.mrf.mxu0
    %v886 = vadd.f32 %v710, %v885
    %v887 = vpop.f32.mrf.mxu0
    %888 = vmatprep.mubr.bf16.mxu0 %v566
    %889 = vmatmul.mubr.bf16.gmra.mxu0 %v671
    %v890 = vpop.f32.mrf.mxu0
    %v891 = vadd.f32 %v710, %v890
    %v892 = vpop.f32.mrf.mxu0
    %v893 = vpop.f32.mrf.mxu0
    %v894 = vadd.f32 %v710, %v893
    %v895 = vpop.f32.mrf.mxu0
    %896 = vmatprep.mubr.bf16.mxu0 %v567
    %897 = vmatmul.mubr.bf16.gmra.mxu0 %v672
    %v898 = vpop.f32.mrf.mxu0
    %v899 = vadd.f32 %v710, %v898
    %v900 = vpop.f32.mrf.mxu0
    %v901 = vpop.f32.mrf.mxu0
    %v902 = vadd.f32 %v710, %v901
    %v903 = vpop.f32.mrf.mxu0
    %904 = vdwg.mxu0
    %v905 = vmax.f32 %v843, 0.0
    %v906 = vmax.f32 %v846, 0.0
    %v907 = vmax.f32 %v851, 0.0
    %v908 = vmax.f32 %v854, 0.0
    %v909 = vmax.f32 %v859, 0.0
    %v910 = vmax.f32 %v862, 0.0
    %v911 = vmax.f32 %v867, 0.0
    %v912 = vmax.f32 %v870, 0.0
    %v913 = vmax.f32 %v875, 0.0
    %v914 = vmax.f32 %v878, 0.0
    %v915 = vmax.f32 %v883, 0.0
    %v916 = vmax.f32 %v886, 0.0
    %v917 = vmax.f32 %v891, 0.0
    %v918 = vmax.f32 %v894, 0.0
    %v919 = vmax.f32 %v899, 0.0
    %v920 = vmax.f32 %v902, 0.0
    %v921 = vpack.c.bf16 %v906, %v905
    %v922 = vpack.c.bf16 %v908, %v907
    %v923 = vpack.c.bf16 %v910, %v909
    %v924 = vpack.c.bf16 %v912, %v911
    %v925 = vpack.c.bf16 %v914, %v913
    %v926 = vpack.c.bf16 %v916, %v915
    %v927 = vpack.c.bf16 %v918, %v917
    %v928 = vpack.c.bf16 %v920, %v919
    %929 = vmatprep.subr.bf16.mxu0 0
    %930 = vmatpush1.bf16.msra.mxu0 %v928
    %931 = vmatprep.subr.bf16.mxu0 0
    %932 = vmatpush1.bf16.msra.mxu0 %v927
    %933 = vmatprep.subr.bf16.mxu0 0
    %934 = vmatpush1.bf16.msra.mxu0 %v926
    %935 = vmatprep.subr.bf16.mxu0 0
    %936 = vmatpush1.bf16.msra.mxu0 %v925
    %937 = vmatprep.subr.bf16.mxu0 0
    %938 = vmatpush1.bf16.msra.mxu0 %v924
    %939 = vmatprep.subr.bf16.mxu0 0
    %940 = vmatpush1.bf16.msra.mxu0 %v923
    %941 = vmatprep.subr.bf16.mxu0 0
    %942 = vmatpush1.bf16.msra.mxu0 %v922
    %943 = vmatprep.subr.bf16.mxu0 0
    %944 = vmatpush1.bf16.msra.mxu0 %v921
    %945 = vmatprep.subr.bf16.mxu0 0
    %946 = vmatpush2.bf16.msra.mxu0 0
    %947 = vmatprep.subr.bf16.mxu0 0
    %948 = vmatpush2.bf16.msra.mxu0 0
    %949 = vmatprep.subr.bf16.mxu0 0
    %950 = vmatpush2.bf16.msra.mxu0 0
    %951 = vmatprep.subr.bf16.mxu0 0
    %952 = vmatpush2.bf16.msra.mxu0 0
    %953 = vmatprep.subr.bf16.mxu0 0
    %954 = vmatpush2.bf16.msra.mxu0 0
    %955 = vmatprep.subr.bf16.mxu0 0
    %956 = vmatpush2.bf16.msra.mxu0 0
    %957 = vmatprep.subr.bf16.mxu0 0
    %958 = vmatpush2.bf16.msra.mxu0 0
    %959 = vmatprep.subr.bf16.mxu0 0
    %960 = vmatpush2.bf16.msra.mxu0 0
    %961 = vmatprep.mubr.bf16.mxu0 0
    %962 = vmatmul.mubr.bf16.gmra.mxu0 %v191
    %v963 = vpop.f32.mrf.mxu0
    %v964 = vadd.f32 0.0, %v963
    %v965 = vpop.f32.mrf.mxu0
    %v966 = vpop.f32.mrf.mxu0
    %v967 = vadd.f32 0.0, %v966
    %v968 = vpop.f32.mrf.mxu0
    %969 = vmatprep.mubr.bf16.mxu0 0
    %970 = vmatmul.mubr.bf16.gmra.mxu0 %v192
    %v971 = vpop.f32.mrf.mxu0
    %v972 = vadd.f32 0.0, %v971
    %v973 = vpop.f32.mrf.mxu0
    %v974 = vpop.f32.mrf.mxu0
    %v975 = vadd.f32 0.0, %v974
    %v976 = vpop.f32.mrf.mxu0
    %977 = vmatprep.mubr.bf16.mxu0 0
    %978 = vmatmul.mubr.bf16.gmra.mxu0 %v193
    %v979 = vpop.f32.mrf.mxu0
    %v980 = vadd.f32 0.0, %v979
    %v981 = vpop.f32.mrf.mxu0
    %v982 = vpop.f32.mrf.mxu0
    %v983 = vadd.f32 0.0, %v982
    %v984 = vpop.f32.mrf.mxu0
    %985 = vmatprep.mubr.bf16.mxu0 0
    %986 = vmatmul.mubr.bf16.gmra.mxu0 %v194
    %v987 = vpop.f32.mrf.mxu0
    %v988 = vadd.f32 0.0, %v987
    %v989 = vpop.f32.mrf.mxu0
    %v990 = vpop.f32.mrf.mxu0
    %v991 = vadd.f32 0.0, %v990
    %v992 = vpop.f32.mrf.mxu0
    %993 = vmatprep.mubr.bf16.mxu0 0
    %994 = vmatmul.mubr.bf16.gmra.mxu0 %v195
    %v995 = vpop.f32.mrf.mxu0
    %v996 = vadd.f32 0.0, %v995
    %v997 = vpop.f32.mrf.mxu0
    %v998 = vpop.f32.mrf.mxu0
    %v999 = vadd.f32 0.0, %v998
    %v1000 = vpop.f32.mrf.mxu0
    %1001 = vmatprep.mubr.bf16.mxu0 0
    %1002 = vmatmul.mubr.bf16.gmra.mxu0 %v196
    %v1003 = vpop.f32.mrf.mxu0
    %v1004 = vadd.f32 0.0, %v1003
    %v1005 = vpop.f32.mrf.mxu0
    %v1006 = vpop.f32.mrf.mxu0
    %v1007 = vadd.f32 0.0, %v1006
    %v1008 = vpop.f32.mrf.mxu0
    %1009 = vmatprep.mubr.bf16.mxu0 0
    %1010 = vmatmul.mubr.bf16.gmra.mxu0 %v197
    %v1011 = vpop.f32.mrf.mxu0
    %v1012 = vadd.f32 0.0, %v1011
    %v1013 = vpop.f32.mrf.mxu0
    %v1014 = vpop.f32.mrf.mxu0
    %v1015 = vadd.f32 0.0, %v1014
    %v1016 = vpop.f32.mrf.mxu0
    %1017 = vmatprep.mubr.bf16.mxu0 0
    %1018 = vmatmul.mubr.bf16.gmra.mxu0 %v198
    %v1019 = vpop.f32.mrf.mxu0
    %v1020 = vadd.f32 0.0, %v1019
    %v1021 = vpop.f32.mrf.mxu0
    %v1022 = vpop.f32.mrf.mxu0
    %v1023 = vadd.f32 0.0, %v1022
    %v1024 = vpop.f32.mrf.mxu0
    %1025 = vdwg.mxu0
    %v1026 = vpack.c.bf16 %v967, %v964
    %v1027 = vpack.c.bf16 %v975, %v972
    %v1028 = vpack.c.bf16 %v983, %v980
    %v1029 = vpack.c.bf16 %v991, %v988
    %v1030 = vpack.c.bf16 %v999, %v996
    %v1031 = vpack.c.bf16 %v1007, %v1004
    %v1032 = vpack.c.bf16 %v1015, %v1012
    %v1033 = vpack.c.bf16 %v1023, %v1020
    %v1034 = vld [vmem:[#allocation10] sm:$0xf]
    %v1035 = vld [vmem:[#allocation10 + $0x4] sm:$0xf]
    %v1036 = vld [vmem:[#allocation10 + $0x8] sm:$0xf]
    %v1037 = vld [vmem:[#allocation10 + $0xc] sm:$0xf]
    %v1038 = vld [vmem:[#allocation10 + $0x10] sm:$0xf]
    %v1039 = vld [vmem:[#allocation10 + $0x14] sm:$0xf]
    %v1040 = vld [vmem:[#allocation10 + $0x18] sm:$0xf]
    %v1041 = vld [vmem:[#allocation10 + $0x1c] sm:$0xf]
    %v1042 = vld [vmem:[#allocation10 + $0x20] sm:$0xf]
    %v1043 = vld [vmem:[#allocation10 + $0x24] sm:$0xf]
    %v1044 = vld [vmem:[#allocation10 + $0x28] sm:$0xf]
    %v1045 = vld [vmem:[#allocation10 + $0x2c] sm:$0xf]
    %v1046 = vld [vmem:[#allocation10 + $0x30] sm:$0xf]
    %v1047 = vld [vmem:[#allocation10 + $0x34] sm:$0xf]
    %v1048 = vld [vmem:[#allocation10 + $0x38] sm:$0xf]
    %v1049 = vld [vmem:[#allocation10 + $0x3c] sm:$0xf]
    %v1050 = vld [vmem:[#allocation10 + $0x40] sm:$0xf]
    %v1051 = vld [vmem:[#allocation10 + $0x44] sm:$0xf]
    %v1052 = vld [vmem:[#allocation10 + $0x48] sm:$0xf]
    %v1053 = vld [vmem:[#allocation10 + $0x4c] sm:$0xf]
    %v1054 = vld [vmem:[#allocation10 + $0x50] sm:$0xf]
    %v1055 = vld [vmem:[#allocation10 + $0x54] sm:$0xf]
    %v1056 = vld [vmem:[#allocation10 + $0x58] sm:$0xf]
    %v1057 = vld [vmem:[#allocation10 + $0x5c] sm:$0xf]
    %v1058 = vld [vmem:[#allocation10 + $0x60] sm:$0xf]
    %v1059 = vld [vmem:[#allocation10 + $0x64] sm:$0xf]
    %v1060 = vld [vmem:[#allocation10 + $0x68] sm:$0xf]
    %v1061 = vld [vmem:[#allocation10 + $0x6c] sm:$0xf]
    %v1062 = vld [vmem:[#allocation10 + $0x70] sm:$0xf]
    %v1063 = vld [vmem:[#allocation10 + $0x74] sm:$0xf]
    %v1064 = vld [vmem:[#allocation10 + $0x78] sm:$0xf]
    %v1065 = vld [vmem:[#allocation10 + $0x7c] sm:$0xf]
    %v1066 = vld [vmem:[%s7] sm:$0x1]
    %v1068 = vlaneseq
    %v1069 = vshrl.u32 %v1068, 7
    %v1070 = vsub.s32 0, %v1069
    %v1071 = vrot.slane %v1066, %v1070
    %v1105 = vunpack.c.l.b16 %v1034
    %v1106 = vunpack.c.l.b16 %v1035
    %v1107 = vunpack.c.l.b16 %v1036
    %v1108 = vunpack.c.l.b16 %v1037
    %v1109 = vunpack.c.l.b16 %v1038
    %v1110 = vunpack.c.l.b16 %v1039
    %v1111 = vunpack.c.l.b16 %v1040
    %v1112 = vunpack.c.l.b16 %v1041
    %v1113 = vunpack.c.l.b16 %v1042
    %v1114 = vunpack.c.l.b16 %v1043
    %v1115 = vunpack.c.l.b16 %v1044
    %v1116 = vunpack.c.l.b16 %v1045
    %v1117 = vunpack.c.l.b16 %v1046
    %v1118 = vunpack.c.l.b16 %v1047
    %v1119 = vunpack.c.l.b16 %v1048
    %v1120 = vunpack.c.l.b16 %v1049
    %v1121 = vunpack.c.l.b16 %v1050
    %v1122 = vunpack.c.l.b16 %v1051
    %v1123 = vunpack.c.l.b16 %v1052
    %v1124 = vunpack.c.l.b16 %v1053
    %v1125 = vunpack.c.l.b16 %v1054
    %v1126 = vunpack.c.l.b16 %v1055
    %v1127 = vunpack.c.l.b16 %v1056
    %v1128 = vunpack.c.l.b16 %v1057
    %v1129 = vunpack.c.l.b16 %v1058
    %v1130 = vunpack.c.l.b16 %v1059
    %v1131 = vunpack.c.l.b16 %v1060
    %v1132 = vunpack.c.l.b16 %v1061
    %v1133 = vunpack.c.l.b16 %v1062
    %v1134 = vunpack.c.l.b16 %v1063
    %v1135 = vunpack.c.l.b16 %v1064
    %v1136 = vunpack.c.l.b16 %v1065
    %v1137 = vpack.c.b16 %v1106, %v1105
    %v1138 = vpack.c.b16 %v1108, %v1107
    %v1139 = vpack.c.b16 %v1110, %v1109
    %v1140 = vpack.c.b16 %v1112, %v1111
    %v1141 = vpack.c.b16 %v1114, %v1113
    %v1142 = vpack.c.b16 %v1116, %v1115
    %v1143 = vpack.c.b16 %v1118, %v1117
    %v1144 = vpack.c.b16 %v1120, %v1119
    %v1145 = vpack.c.b16 %v1122, %v1121
    %v1146 = vpack.c.b16 %v1124, %v1123
    %v1147 = vpack.c.b16 %v1126, %v1125
    %v1148 = vpack.c.b16 %v1128, %v1127
    %v1149 = vpack.c.b16 %v1130, %v1129
    %v1150 = vpack.c.b16 %v1132, %v1131
    %v1151 = vpack.c.b16 %v1134, %v1133
    %v1152 = vpack.c.b16 %v1136, %v1135
    %1169 = vmatprep.subr.bf16.mxu0 0
    %1170 = vmatpush1.bf16.msra.mxu0 %v1144
    %1171 = vmatprep.subr.bf16.mxu0 0
    %1172 = vmatpush1.bf16.msra.mxu0 %v1143
    %1173 = vmatprep.subr.bf16.mxu0 0
    %1174 = vmatpush1.bf16.msra.mxu0 %v1142
    %1175 = vmatprep.subr.bf16.mxu0 0
    %1176 = vmatpush1.bf16.msra.mxu0 %v1141
    %1177 = vmatprep.subr.bf16.mxu0 0
    %1178 = vmatpush1.bf16.msra.mxu0 %v1140
    %1179 = vmatprep.subr.bf16.mxu0 0
    %1180 = vmatpush1.bf16.msra.mxu0 %v1139
    %1181 = vmatprep.subr.bf16.mxu0 0
    %1182 = vmatpush1.bf16.msra.mxu0 %v1138
    %1183 = vmatprep.subr.bf16.mxu0 0
    %1184 = vmatpush1.bf16.msra.mxu0 %v1137
    %1185 = vmatprep.subr.bf16.mxu0 0
    %1186 = vmatpush2.bf16.msra.mxu0 %v1152
    %1187 = vmatprep.subr.bf16.mxu0 0
    %1188 = vmatpush2.bf16.msra.mxu0 %v1151
    %1189 = vmatprep.subr.bf16.mxu0 0
    %1190 = vmatpush2.bf16.msra.mxu0 %v1150
    %1191 = vmatprep.subr.bf16.mxu0 0
    %1192 = vmatpush2.bf16.msra.mxu0 %v1149
    %1193 = vmatprep.subr.bf16.mxu0 0
    %1194 = vmatpush2.bf16.msra.mxu0 %v1148
    %1195 = vmatprep.subr.bf16.mxu0 0
    %1196 = vmatpush2.bf16.msra.mxu0 %v1147
    %1197 = vmatprep.subr.bf16.mxu0 0
    %1198 = vmatpush2.bf16.msra.mxu0 %v1146
    %1199 = vmatprep.subr.bf16.mxu0 0
    %1200 = vmatpush2.bf16.msra.mxu0 %v1145
    %1201 = vmatprep.mubr.bf16.mxu0 %v921
    %1202 = vmatmul.mubr.bf16.gmra.mxu0 %v1026
    %v1203 = vpop.f32.mrf.mxu0
    %v1204 = vadd.f32 %v1071, %v1203
    %v1205 = vpop.f32.mrf.mxu0
    %v1206 = vpop.f32.mrf.mxu0
    %v1207 = vadd.f32 %v1071, %v1206
    %v1208 = vpop.f32.mrf.mxu0
    %1209 = vmatprep.mubr.bf16.mxu0 %v922
    %1210 = vmatmul.mubr.bf16.gmra.mxu0 %v1027
    %v1211 = vpop.f32.mrf.mxu0
    %v1212 = vadd.f32 %v1071, %v1211
    %v1213 = vpop.f32.mrf.mxu0
    %v1214 = vpop.f32.mrf.mxu0
    %v1215 = vadd.f32 %v1071, %v1214
    %v1216 = vpop.f32.mrf.mxu0
    %1217 = vmatprep.mubr.bf16.mxu0 %v923
    %1218 = vmatmul.mubr.bf16.gmra.mxu0 %v1028
    %v1219 = vpop.f32.mrf.mxu0
    %v1220 = vadd.f32 %v1071, %v1219
    %v1221 = vpop.f32.mrf.mxu0
    %v1222 = vpop.f32.mrf.mxu0
    %v1223 = vadd.f32 %v1071, %v1222
    %v1224 = vpop.f32.mrf.mxu0
    %1225 = vmatprep.mubr.bf16.mxu0 %v924
    %1226 = vmatmul.mubr.bf16.gmra.mxu0 %v1029
    %v1227 = vpop.f32.mrf.mxu0
    %v1228 = vadd.f32 %v1071, %v1227
    %v1229 = vpop.f32.mrf.mxu0
    %v1230 = vpop.f32.mrf.mxu0
    %v1231 = vadd.f32 %v1071, %v1230
    %v1232 = vpop.f32.mrf.mxu0
    %1233 = vmatprep.mubr.bf16.mxu0 %v925
    %1234 = vmatmul.mubr.bf16.gmra.mxu0 %v1030
    %v1235 = vpop.f32.mrf.mxu0
    %v1236 = vadd.f32 %v1071, %v1235
    %v1237 = vpop.f32.mrf.mxu0
    %v1238 = vpop.f32.mrf.mxu0
    %v1239 = vadd.f32 %v1071, %v1238
    %v1240 = vpop.f32.mrf.mxu0
    %1241 = vmatprep.mubr.bf16.mxu0 %v926
    %1242 = vmatmul.mubr.bf16.gmra.mxu0 %v1031
    %v1243 = vpop.f32.mrf.mxu0
    %v1244 = vadd.f32 %v1071, %v1243
    %v1245 = vpop.f32.mrf.mxu0
    %v1246 = vpop.f32.mrf.mxu0
    %v1247 = vadd.f32 %v1071, %v1246
    %v1248 = vpop.f32.mrf.mxu0
    %1249 = vmatprep.mubr.bf16.mxu0 %v927
    %1250 = vmatmul.mubr.bf16.gmra.mxu0 %v1032
    %v1251 = vpop.f32.mrf.mxu0
    %v1252 = vadd.f32 %v1071, %v1251
    %v1253 = vpop.f32.mrf.mxu0
    %v1254 = vpop.f32.mrf.mxu0
    %v1255 = vadd.f32 %v1071, %v1254
    %v1256 = vpop.f32.mrf.mxu0
    %1257 = vmatprep.mubr.bf16.mxu0 %v928
    %1258 = vmatmul.mubr.bf16.gmra.mxu0 %v1033
    %v1259 = vpop.f32.mrf.mxu0
    %v1260 = vadd.f32 %v1071, %v1259
    %v1261 = vpop.f32.mrf.mxu0
    %v1262 = vpop.f32.mrf.mxu0
    %v1263 = vadd.f32 %v1071, %v1262
    %v1264 = vpop.f32.mrf.mxu0
    %1265 = vdwg.mxu0
    %v1266 = vmax.f32 %v1204, 0.0
    %v1267 = vmax.f32 %v1207, 0.0
    %v1268 = vmax.f32 %v1212, 0.0
    %v1269 = vmax.f32 %v1215, 0.0
    %v1270 = vmax.f32 %v1220, 0.0
    %v1271 = vmax.f32 %v1223, 0.0
    %v1272 = vmax.f32 %v1228, 0.0
    %v1273 = vmax.f32 %v1231, 0.0
    %v1274 = vmax.f32 %v1236, 0.0
    %v1275 = vmax.f32 %v1239, 0.0
    %v1276 = vmax.f32 %v1244, 0.0
    %v1277 = vmax.f32 %v1247, 0.0
    %v1278 = vmax.f32 %v1252, 0.0
    %v1279 = vmax.f32 %v1255, 0.0
    %v1280 = vmax.f32 %v1260, 0.0
    %v1281 = vmax.f32 %v1263, 0.0
    %v1282 = vpack.c.bf16 %v1267, %v1266
    %v1283 = vpack.c.bf16 %v1269, %v1268
    %v1284 = vpack.c.bf16 %v1271, %v1270
    %v1285 = vpack.c.bf16 %v1273, %v1272
    %v1286 = vpack.c.bf16 %v1275, %v1274
    %v1287 = vpack.c.bf16 %v1277, %v1276
    %v1288 = vpack.c.bf16 %v1279, %v1278
    %v1289 = vpack.c.bf16 %v1281, %v1280
    %v1290 = vld [vmem:[#allocation11] sm:$0xf]
    %v1291 = vld [vmem:[#allocation11 + $0x4] sm:$0xf]
    %v1292 = vld [vmem:[#allocation11 + $0x8] sm:$0xf]
    %v1293 = vld [vmem:[#allocation11 + $0xc] sm:$0xf]
    %v1294 = vld [vmem:[#allocation11 + $0x10] sm:$0xf]
    %v1295 = vld [vmem:[#allocation11 + $0x14] sm:$0xf]
    %v1296 = vld [vmem:[#allocation11 + $0x18] sm:$0xf]
    %v1297 = vld [vmem:[#allocation11 + $0x1c] sm:$0xf]
    %v1298 = vld [vmem:[#allocation11 + $0x20] sm:$0xf]
    %v1299 = vld [vmem:[#allocation11 + $0x24] sm:$0xf]
    %v1300 = vld [vmem:[#allocation11 + $0x28] sm:$0xf]
    %v1301 = vld [vmem:[#allocation11 + $0x2c] sm:$0xf]
    %v1302 = vld [vmem:[#allocation11 + $0x30] sm:$0xf]
    %v1303 = vld [vmem:[#allocation11 + $0x34] sm:$0xf]
    %v1304 = vld [vmem:[#allocation11 + $0x38] sm:$0xf]
    %v1305 = vld [vmem:[#allocation11 + $0x3c] sm:$0xf]
    %v1306 = vld [vmem:[%s9] sm:$0x1]
    %v1308 = vlaneseq
    %v1309 = vshrl.u32 %v1308, 7
    %v1310 = vsub.s32 0, %v1309
    %v1311 = vrot.slane %v1306, %v1310
    %v1329 = vunpack.c.l.b16 %v1290
    %v1330 = vunpack.c.l.b16 %v1291
    %v1331 = vunpack.c.l.b16 %v1292
    %v1332 = vunpack.c.l.b16 %v1293
    %v1333 = vunpack.c.l.b16 %v1294
    %v1334 = vunpack.c.l.b16 %v1295
    %v1335 = vunpack.c.l.b16 %v1296
    %v1336 = vunpack.c.l.b16 %v1297
    %v1337 = vunpack.c.l.b16 %v1298
    %v1338 = vunpack.c.l.b16 %v1299
    %v1339 = vunpack.c.l.b16 %v1300
    %v1340 = vunpack.c.l.b16 %v1301
    %v1341 = vunpack.c.l.b16 %v1302
    %v1342 = vunpack.c.l.b16 %v1303
    %v1343 = vunpack.c.l.b16 %v1304
    %v1344 = vunpack.c.l.b16 %v1305
    %v1345 = vpack.c.b16 %v1330, %v1329
    %v1346 = vpack.c.b16 %v1332, %v1331
    %v1347 = vpack.c.b16 %v1334, %v1333
    %v1348 = vpack.c.b16 %v1336, %v1335
    %v1349 = vpack.c.b16 %v1338, %v1337
    %v1350 = vpack.c.b16 %v1340, %v1339
    %v1351 = vpack.c.b16 %v1342, %v1341
    %v1352 = vpack.c.b16 %v1344, %v1343
    %1361 = vmatprep.subr.bf16.mxu0 0
    %1362 = vmatpush1.bf16.msra.mxu0 %v1352
    %1363 = vmatprep.subr.bf16.mxu0 0
    %1364 = vmatpush1.bf16.msra.mxu0 %v1351
    %1365 = vmatprep.subr.bf16.mxu0 0
    %1366 = vmatpush1.bf16.msra.mxu0 %v1350
    %1367 = vmatprep.subr.bf16.mxu0 0
    %1368 = vmatpush1.bf16.msra.mxu0 %v1349
    %1369 = vmatprep.subr.bf16.mxu0 0
    %1370 = vmatpush1.bf16.msra.mxu0 %v1348
    %1371 = vmatprep.subr.bf16.mxu0 0
    %1372 = vmatpush1.bf16.msra.mxu0 %v1347
    %1373 = vmatprep.subr.bf16.mxu0 0
    %1374 = vmatpush1.bf16.msra.mxu0 %v1346
    %1375 = vmatprep.subr.bf16.mxu0 0
    %1376 = vmatpush1.bf16.msra.mxu0 %v1345
    %1377 = vmatprep.subr.bf16.mxu0 0
    %1378 = vmatpush2.bf16.msra.mxu0 0
    %1379 = vmatprep.subr.bf16.mxu0 0
    %1380 = vmatpush2.bf16.msra.mxu0 0
    %1381 = vmatprep.subr.bf16.mxu0 0
    %1382 = vmatpush2.bf16.msra.mxu0 0
    %1383 = vmatprep.subr.bf16.mxu0 0
    %1384 = vmatpush2.bf16.msra.mxu0 0
    %1385 = vmatprep.subr.bf16.mxu0 0
    %1386 = vmatpush2.bf16.msra.mxu0 0
    %1387 = vmatprep.subr.bf16.mxu0 0
    %1388 = vmatpush2.bf16.msra.mxu0 0
    %1389 = vmatprep.subr.bf16.mxu0 0
    %1390 = vmatpush2.bf16.msra.mxu0 0
    %1391 = vmatprep.subr.bf16.mxu0 0
    %1392 = vmatpush2.bf16.msra.mxu0 0
    %1393 = vmatprep.mubr.bf16.mxu0 0
    %1394 = vmatmul.mubr.bf16.gmra.mxu0 %v1282
    %v1395 = vpop.f32.mrf.mxu0
    %v1396 = vadd.f32 %v1311, %v1395
    %v1397 = vpop.f32.mrf.mxu0
    %v1398 = vpop.f32.mrf.mxu0
    %v1399 = vadd.f32 %v1311, %v1398
    %v1400 = vpop.f32.mrf.mxu0
    %1401 = vmatprep.mubr.bf16.mxu0 0
    %1402 = vmatmul.mubr.bf16.gmra.mxu0 %v1283
    %v1403 = vpop.f32.mrf.mxu0
    %v1404 = vadd.f32 %v1311, %v1403
    %v1405 = vpop.f32.mrf.mxu0
    %v1406 = vpop.f32.mrf.mxu0
    %v1407 = vadd.f32 %v1311, %v1406
    %v1408 = vpop.f32.mrf.mxu0
    %1409 = vmatprep.mubr.bf16.mxu0 0
    %1410 = vmatmul.mubr.bf16.gmra.mxu0 %v1284
    %v1411 = vpop.f32.mrf.mxu0
    %v1412 = vadd.f32 %v1311, %v1411
    %v1413 = vpop.f32.mrf.mxu0
    %v1414 = vpop.f32.mrf.mxu0
    %v1415 = vadd.f32 %v1311, %v1414
    %v1416 = vpop.f32.mrf.mxu0
    %1417 = vmatprep.mubr.bf16.mxu0 0
    %1418 = vmatmul.mubr.bf16.gmra.mxu0 %v1285
    %v1419 = vpop.f32.mrf.mxu0
    %v1420 = vadd.f32 %v1311, %v1419
    %v1421 = vpop.f32.mrf.mxu0
    %v1422 = vpop.f32.mrf.mxu0
    %v1423 = vadd.f32 %v1311, %v1422
    %v1424 = vpop.f32.mrf.mxu0
    %1425 = vmatprep.mubr.bf16.mxu0 0
    %1426 = vmatmul.mubr.bf16.gmra.mxu0 %v1286
    %v1427 = vpop.f32.mrf.mxu0
    %v1428 = vadd.f32 %v1311, %v1427
    %v1429 = vpop.f32.mrf.mxu0
    %v1430 = vpop.f32.mrf.mxu0
    %v1431 = vadd.f32 %v1311, %v1430
    %v1432 = vpop.f32.mrf.mxu0
    %1433 = vmatprep.mubr.bf16.mxu0 0
    %1434 = vmatmul.mubr.bf16.gmra.mxu0 %v1287
    %v1435 = vpop.f32.mrf.mxu0
    %v1436 = vadd.f32 %v1311, %v1435
    %v1437 = vpop.f32.mrf.mxu0
    %v1438 = vpop.f32.mrf.mxu0
    %v1439 = vadd.f32 %v1311, %v1438
    %v1440 = vpop.f32.mrf.mxu0
    %1441 = vmatprep.mubr.bf16.mxu0 0
    %1442 = vmatmul.mubr.bf16.gmra.mxu0 %v1288
    %v1443 = vpop.f32.mrf.mxu0
    %v1444 = vadd.f32 %v1311, %v1443
    %v1445 = vpop.f32.mrf.mxu0
    %v1446 = vpop.f32.mrf.mxu0
    %v1447 = vadd.f32 %v1311, %v1446
    %v1448 = vpop.f32.mrf.mxu0
    %1449 = vmatprep.mubr.bf16.mxu0 0
    %1450 = vmatmul.mubr.bf16.gmra.mxu0 %v1289
    %v1451 = vpop.f32.mrf.mxu0
    %v1452 = vadd.f32 %v1311, %v1451
    %v1453 = vpop.f32.mrf.mxu0
    %v1454 = vpop.f32.mrf.mxu0
    %v1455 = vadd.f32 %v1311, %v1454
    %v1456 = vpop.f32.mrf.mxu0
    %1457 = vdwg.mxu0
    %1458 = vst [vmem:[#allocation13] sm:$0xff] %v1396
    %1459 = vst [vmem:[#allocation13 + $0x8] sm:$0xff] %v1399
    %1460 = vst [vmem:[#allocation13 + $0x10] sm:$0xff] %v1404
    %1461 = vst [vmem:[#allocation13 + $0x18] sm:$0xff] %v1407
    %1462 = vst [vmem:[#allocation13 + $0x20] sm:$0xff] %v1412
    %1463 = vst [vmem:[#allocation13 + $0x28] sm:$0xff] %v1415
    %1464 = vst [vmem:[#allocation13 + $0x30] sm:$0xff] %v1420
    %1465 = vst [vmem:[#allocation13 + $0x38] sm:$0xff] %v1423
    %1466 = vst [vmem:[#allocation13 + $0x40] sm:$0xff] %v1428
    %1467 = vst [vmem:[#allocation13 + $0x48] sm:$0xff] %v1431
    %1468 = vst [vmem:[#allocation13 + $0x50] sm:$0xff] %v1436
    %1469 = vst [vmem:[#allocation13 + $0x58] sm:$0xff] %v1439
    %1470 = vst [vmem:[#allocation13 + $0x60] sm:$0xff] %v1444
    %1471 = vst [vmem:[#allocation13 + $0x68] sm:$0xff] %v1447
    %1472 = vst [vmem:[#allocation13 + $0x70] sm:$0xff] %v1452
    %1473 = vst [vmem:[#allocation13 + $0x78] sm:$0xff] %v1455
    // Predicated region
    $region66: #{tpu_custom_call.1} parent=1 // pred_check
      _
    $region67: #{tpu_custom_call.1} parent=1 // pred_check_branch
      %1475 = sbr.rel (0) target = $region69
    $region68: #{tpu_custom_call.1} parent=1 // pred_region
      %s1477 = ssub.s32 2048, 2048
      %1478 = vsyncadd [#allocation4], %s1477
      %s1479 = sshll.u32 [#allocation13], 4
      %s1480 = int_to_ptr.vmem [resolvable:$true] %s1479
      %1485 = dma.vmem_to_hbm [thread:$0]  %s1480, 2048, %s10, [#allocation4], 128, 128, 8
    $region69: #{tpu_custom_call.1} parent=1 // pred_fallthru
      _
    // Predicated region
    $region70: #{tpu_custom_call.1} parent=1 // pred_check
      _
    $region71: #{tpu_custom_call.1} parent=1 // pred_check_branch
      %1487 = sbr.rel (0) target = $region73
    $region72: #{tpu_custom_call.1} parent=1 // pred_region
      %1488 = dma.done [#allocation4], 2048
    $region73: #{tpu_custom_call.1} parent=1 // pred_fallthru
      _
    %1489 = vsyncpa [#allocation3], 1
    %1490 = vsyncpa [#allocation6], 1
    %1491 = vsyncpa [#allocation9], 1
    %1492 = vsyncpa [#allocation12], 1
    %1493 = vsyncpa [#allocation4], 1

</llo_original>
